<compile_context>
chip_gen: v7x
topology: tpu7x:2x2x1
jax: 0.10.0
libtpu: 0.0.40
codegen_flags: <defaults>
</compile_context>

<pallas_src>
import functools
import math

import jax
import jax.numpy as jnp
from jax.experimental import pallas as pl
from jax.experimental.pallas import tpu as pltpu


# ------------------------------ Pallas kernel ------------------------------

def _tfeq_step_kernel(x_ref, pe_ref, vec_ref, we_ref, wqkv_ref, wo_ref,
                      w1_ref, w2_ref, w3_ref, o_ref, acc_ref,
                      *, H, dk, D, FF, J, C, eps):
    """One grid step = one time index n, processing the b rows x[:, n, :].

    Attention couples exactly these b rows (batch_first=False semantics), the
    FF / LayerNorm parts are row-local, and the folded decoder contributes
    src_n @ w3[n] to the per-sample logits, accumulated in `acc_ref`.
    """
    f32 = jnp.float32
    n = pl.program_id(0)
    last = pl.num_programs(0) - 1
    scale = 1.0 / math.sqrt(dk)

    @pl.when(n == 0)
    def _():
        acc_ref[...] = jnp.zeros_like(acc_ref)

    # packed bias / scale vectors (a single DMA for all of them)
    be   = vec_ref[0:1, :D]
    bqkv = vec_ref[1:2, :3 * D]
    bo   = vec_ref[2:3, :D]
    n1w  = vec_ref[3:4, :D]
    n1b  = vec_ref[4:5, :D]
    b1   = vec_ref[5:6, :FF]
    b2   = vec_ref[6:7, :D]
    n2w  = vec_ref[7:8, :D]
    n2b  = vec_ref[8:9, :D]

    def layernorm(z, g, b_):
        mu = jnp.mean(z, axis=-1, keepdims=True)
        zc = z - mu
        var = jnp.mean(zc * zc, axis=-1, keepdims=True)      # biased, as in PyTorch
        return zc * jax.lax.rsqrt(var + eps) * g + b_

    x_blk = x_ref[...]                                       # (b, C)

    # ---- 1) input embedding + positional row (VPU rank-1 FMAs; K=C is tiny) ----
    src = be + pe_ref[...]                                   # (1, D)
    for k in range(C):                                       # C small, static unroll
        src = src + x_blk[:, k:k + 1] * we_ref[k:k + 1, :]   # -> (b, D)

    # ---- 2) TransformerEncoderLayer on the b rows sharing this time index ------
    qkv = jnp.dot(src, wqkv_ref[...], preferred_element_type=f32) + bqkv  # (b, 3D)
    attn = jnp.zeros_like(src)
    for hh in range(H):                       # per-head temporaries are only (b, b)
        lo = hh * dk
        qh = qkv[:, lo:lo + dk]
        kh = qkv[:, D + lo:D + lo + dk]
        vh = qkv[:, 2 * D + lo:2 * D + lo + dk]
        s = jax.lax.dot_general(qh, kh, (((1,), (1,)), ((), ())),
                                preferred_element_type=f32) * scale      # (b, b)
        s = s - jnp.max(s, axis=-1, keepdims=True)
        p_ = jnp.exp(s)
        p_ = p_ / jnp.sum(p_, axis=-1, keepdims=True)        # exact softmax
        ctx = jnp.dot(p_, vh, preferred_element_type=f32)                # (b, dk)
        # concat-of-heads @ Wo^T  ==  sum_h ctx_h @ Wo^T[rows h*dk:(h+1)*dk]
        attn = attn + jnp.dot(ctx, wo_ref[lo:lo + dk, :],
                              preferred_element_type=f32)                # (b, D)
    attn = attn + bo

    src = layernorm(src + attn, n1w, n1b)

    ff = jnp.dot(src, w1_ref[...], preferred_element_type=f32) + b1
    ff = jnp.maximum(ff, 0.0)
    ff = jnp.dot(ff, w2_ref[...], preferred_element_type=f32) + b2
    src = layernorm(src + ff, n2w, n2b)

    # ---- 3) folded decoder (Conv1d k=1 + Flatten + fc): contribution of time n --
    acc_ref[...] += jnp.dot(src, w3_ref[...], preferred_element_type=f32)  # (b, J)

    # ---- 4) finalize: bias + log_softmax, single HBM write ---------------------
    @pl.when(n == last)
    def _():
        logits = acc_ref[...] + vec_ref[9:10, :J]
        m = jnp.max(logits, axis=-1, keepdims=True)
        z = logits - m
        lse = jnp.log(jnp.sum(jnp.exp(z), axis=-1, keepdims=True))
        o_ref[...] = (z - lse).astype(o_ref.dtype)


# ----------------------------------- forward --------------------------------------

def tfeq_conv_forward(x, p, nhead):
    b, t, c = x.shape
    D = p["emb_w"].shape[0]
    FF = p["lin1_w"].shape[0]
    H = nhead
    dk = D // H
    J = p["fc_w"].shape[0]
    f32 = jnp.float32

    # ---- tiny, exact host-side weight preprocessing (traced with the jit) ------
    we = p["emb_w"].T.astype(f32)                     # (c, D)
    wqkv = p["in_proj_w"].T.astype(f32)               # (D, 3D)  fused QKV projection
    wo = p["out_proj_w"].T.astype(f32)                # (D, D)
    w1 = p["lin1_w"].T.astype(f32)                    # (D, FF)
    w2 = p["lin2_w"].T.astype(f32)                    # (FF, D)

    # Fold Conv1d(k=1) + Flatten + fc into one (t, D, J) map over the encoder
    # output's contiguous per-sample row (reproduces .view(-1, D, t) exactly).
    cw = p["conv_w"][:, :, 0]                         # (c, D)
    fcw = p["fc_w"].reshape(J, c, t)                  # fc input index = o*t + j
    w_eff = jnp.einsum("oi,jop->ipj", cw, fcw)        # (D, t, J); flat m = i*t + p
    w3 = w_eff.reshape(t * D, J).reshape(t, D, J)     # re-index m = n*D + d
    b3 = p["fc_b"] + jnp.einsum("jop,o->j", fcw, p["conv_b"])   # (J,)

    # Pack every bias / LayerNorm vector into ONE (rows, W) buffer -> one DMA.
    W = max(3 * D, FF, D, J)
    vec_rows = [p["emb_b"], p["in_proj_b"], p["out_proj_b"],
                p["norm1_w"], p["norm1_b"], p["lin1_b"], p["lin2_b"],
                p["norm2_w"], p["norm2_b"], b3]
    vec = jnp.zeros((len(vec_rows), W), f32)
    for r, v in enumerate(vec_rows):
        vec = vec.at[r, :v.shape[0]].set(v.astype(f32))

    x_tbc = jnp.transpose(x.astype(f32), (1, 0, 2))   # (t, b, c): time-major blocks
    pe = p["pe"].astype(f32).reshape(t, 1, D)         # (t, 1, D): one PE row per step

    kernel = functools.partial(_tfeq_step_kernel, H=H, dk=dk, D=D, FF=FF, J=J,
                               C=c, eps=1e-5)

    grid_spec = pltpu.PrefetchScalarGridSpec(
        num_scalar_prefetch=0,
        grid=(t,),                                             # one step per time index
        in_specs=[
            pl.BlockSpec((None, b, c), lambda n: (n, 0, 0)),   # x[:, n, :]
            pl.BlockSpec((None, 1, D), lambda n: (n, 0, 0)),   # pe[n]
            pl.BlockSpec(vec.shape,    lambda n: (0, 0)),      # packed bias vectors
            pl.BlockSpec((c, D),       lambda n: (0, 0)),      # we      (resident)
            pl.BlockSpec((D, 3 * D),   lambda n: (0, 0)),      # Wqkv    (resident)
            pl.BlockSpec((D, D),       lambda n: (0, 0)),      # Wo      (resident)
            pl.BlockSpec((D, FF),      lambda n: (0, 0)),      # W1      (resident)
            pl.BlockSpec((FF, D),      lambda n: (0, 0)),      # W2      (resident)
            pl.BlockSpec((None, D, J), lambda n: (n, 0, 0)),   # folded decoder w3[n]
        ],
        out_specs=pl.BlockSpec((b, J), lambda n: (0, 0)),      # VMEM-resident output
        scratch_shapes=[pltpu.VMEM((b, J), f32)],              # logits accumulator
    )

    return pl.pallas_call(
        kernel,
        out_shape=jax.ShapeDtypeStruct((b, J), f32),
        grid_spec=grid_spec,
        compiler_params=pltpu.CompilerParams(
            dimension_semantics=("arbitrary",),                # n is a reduction axis
            vmem_limit_bytes=32 * 1024 * 1024,
        ),
    )(x_tbc, pe, vec, we, wqkv, wo, w1, w2, w3)


# ------------------------------ pure-JAX reference ---------------------------------

def tfeq_conv_reference(x, p, nhead):
    """Mirrors the PyTorch module (eval mode) op-for-op, without the kernel folds."""
    b, t, c = x.shape
    D = p["emb_w"].shape[0]
    H = nhead
    dk = D // H

    h = x @ p["emb_w"].T + p["emb_b"]
    h = h + p["pe"][None, :, :]

    src = h                                            # (b, t, D); seq axis = b
    q = src @ p["in_proj_w"][:D].T + p["in_proj_b"][:D]
    k = src @ p["in_proj_w"][D:2 * D].T + p["in_proj_b"][D:2 * D]
    v = src @ p["in_proj_w"][2 * D:].T + p["in_proj_b"][2 * D:]
    qh = q.reshape(b, t, H, dk)
    kh = k.reshape(b, t, H, dk)
    vh = v.reshape(b, t, H, dk)
    s = jnp.einsum("ithd,jthd->thij", qh, kh) / math.sqrt(dk)
    pmat = jax.nn.softmax(s, axis=-1)
    ctx = jnp.einsum("thij,jthd->ithd", pmat, vh).reshape(b, t, D)
    attn = ctx @ p["out_proj_w"].T + p["out_proj_b"]

    def ln(z, g, b_):
        mu = z.mean(-1, keepdims=True)
        var = ((z - mu) ** 2).mean(-1, keepdims=True)
        return (z - mu) * jax.lax.rsqrt(var + 1e-5) * g + b_

    src = ln(src + attn, p["norm1_w"], p["norm1_b"])
    ff = jnp.maximum(src @ p["lin1_w"].T + p["lin1_b"], 0.0)
    ff = ff @ p["lin2_w"].T + p["lin2_b"]
    src = ln(src + ff, p["norm2_w"], p["norm2_b"])

    vv = src.reshape(b, t * D).reshape(b, D, t)        # .view(-1, D, t)
    y = jnp.einsum("oi,bij->boj", p["conv_w"][:, :, 0], vv) + p["conv_b"][None, :, None]
    logits = y.reshape(b, c * t) @ p["fc_w"].T + p["fc_b"]
    return jax.nn.log_softmax(logits, axis=1)


# -------------------------------- parameter init -----------------------------------

def init_params(key, *, channel, dmodel, dim_ff, time_in):
    ks = jax.random.split(key, 16)

    def n(k, shape, scale=0.05):
        return scale * jax.random.normal(k, shape, jnp.float32)

    return {
        "emb_w": n(ks[0], (dmodel, channel)),
        "emb_b": n(ks[1], (dmodel,)),
        "pe": n(ks[2], (time_in, dmodel), 0.1),
        "in_proj_w": n(ks[3], (3 * dmodel, dmodel)),
        "in_proj_b": n(ks[4], (3 * dmodel,)),
        "out_proj_w": n(ks[5], (dmodel, dmodel)),
        "out_proj_b": n(ks[6], (dmodel,)),
        "lin1_w": n(ks[7], (dim_ff, dmodel)),
        "lin1_b": n(ks[8], (dim_ff,)),
        "lin2_w": n(ks[9], (dmodel, dim_ff)),
        "lin2_b": n(ks[10], (dmodel,)),
        "norm1_w": jnp.ones((dmodel,), jnp.float32),
        "norm1_b": jnp.zeros((dmodel,), jnp.float32),
        "norm2_w": jnp.ones((dmodel,), jnp.float32),
        "norm2_b": jnp.zeros((dmodel,), jnp.float32),
        "conv_w": n(ks[11], (channel, dmodel, 1)),
        "conv_b": n(ks[12], (channel,)),
        "fc_w": n(ks[13], (2, time_in * channel)),
        "fc_b": n(ks[14], (2,)),
    }


# -------------------------------------- main ----------------------------------------

if __name__ == "__main__":
    # small synthetic config: channel=4, dmodel=32, nhead=4, dim_ff=32, time_in=8
    B, T, C = 2, 8, 4
    D, H, FF = 32, 4, 32

    key = jax.random.PRNGKey(0)
    k_par, k_x = jax.random.split(key)
    params = init_params(k_par, channel=C, dmodel=D, dim_ff=FF, time_in=T)
    x = jax.random.normal(k_x, (B, T, C), jnp.float32)

    fwd = jax.jit(tfeq_conv_forward, static_argnums=2)
    out = jax.block_until_ready(fwd(x, params, H))

    assert out.shape == (B, 2)
    assert bool(jnp.all(jnp.isfinite(out)))
    # log_softmax rows must exponentiate-sum to ~1
    assert bool(jnp.allclose(jnp.sum(jnp.exp(out), axis=1), 1.0, atol=1e-3))
    # cross-check against the un-fused pure-JAX reference (default matmul precision)
    ref = tfeq_conv_reference(x, params, H)
    assert bool(jnp.allclose(out, ref, atol=5e-2, rtol=5e-2))

    print("KERNEL_OK")
</pallas_src>

<mosaic_0001>
module attributes {stable_mosaic.version = 11 : i64} {
  func.func @_tfeq_step_kernel(%arg0: i32, %arg1: memref<1x2x4xf32, #tpu.memory_space<vmem>>, %arg2: memref<1x1x32xf32, #tpu.memory_space<vmem>>, %arg3: memref<10x96xf32, #tpu.memory_space<vmem>>, %arg4: memref<4x32xf32, #tpu.memory_space<vmem>>, %arg5: memref<32x96xf32, #tpu.memory_space<vmem>>, %arg6: memref<32x32xf32, #tpu.memory_space<vmem>>, %arg7: memref<32x32xf32, #tpu.memory_space<vmem>>, %arg8: memref<32x32xf32, #tpu.memory_space<vmem>>, %arg9: memref<1x32x2xf32, #tpu.memory_space<vmem>>, %arg10: memref<2x2xf32, #tpu.memory_space<vmem>>, %arg11: memref<2x2xf32, #tpu.memory_space<vmem>>) attributes {dimension_semantics = [#tpu.dimension_semantics<arbitrary>], iteration_bounds = array<i64: 8>, scalar_prefetch = 0 : i64, scratch_operands = 1 : i64, tpu.core_type = #tpu.core_type<tc>, window_params = [{transform_indices = @transform_0, window_bounds = array<i64: 1, 2, 4>}, {transform_indices = @transform_1, window_bounds = array<i64: 1, 1, 32>}, {pipeline_mode = #tpu.pipeline_mode<synchronous>, transform_indices = @transform_2, window_bounds = array<i64: 10, 96>}, {pipeline_mode = #tpu.pipeline_mode<synchronous>, transform_indices = @transform_3, window_bounds = array<i64: 4, 32>}, {pipeline_mode = #tpu.pipeline_mode<synchronous>, transform_indices = @transform_4, window_bounds = array<i64: 32, 96>}, {pipeline_mode = #tpu.pipeline_mode<synchronous>, transform_indices = @transform_5, window_bounds = array<i64: 32, 32>}, {pipeline_mode = #tpu.pipeline_mode<synchronous>, transform_indices = @transform_6, window_bounds = array<i64: 32, 32>}, {pipeline_mode = #tpu.pipeline_mode<synchronous>, transform_indices = @transform_7, window_bounds = array<i64: 32, 32>}, {transform_indices = @transform_8, window_bounds = array<i64: 1, 32, 2>}, {pipeline_mode = #tpu.pipeline_mode<synchronous>, transform_indices = @transform_9, window_bounds = array<i64: 2, 2>}]} {
    %c0_i32 = arith.constant 0 : i32
    %0 = arith.cmpi eq, %arg0, %c0_i32 : i32
    %1 = arith.extui %0 : i1 to i32
    %c0_i32_0 = arith.constant 0 : i32
    %2 = arith.cmpi ne, %1, %c0_i32_0 : i32
    scf.if %2 {
      %cst_83 = arith.constant 0.000000e+00 : f32
      %186 = vector.broadcast %cst_83 : f32 to vector<2x2xf32>
      %c0_84 = arith.constant 0 : index
      %c0_85 = arith.constant 0 : index
      %187 = vector.load %arg11[%c0_84, %c0_85] : memref<2x2xf32, #tpu.memory_space<vmem>>, vector<2x2xf32>
      tpu.vector_store %arg11[%c0_84, %c0_85], %186 {strides = array<i32>} : memref<2x2xf32, #tpu.memory_space<vmem>>, vector<2x2xf32>,
    } else {
    }
    %c0 = arith.constant 0 : index
    %c0_1 = arith.constant 0 : index
    %3 = vector.load %arg3[%c0, %c0_1] : memref<10x96xf32, #tpu.memory_space<vmem>>, vector<1x32xf32>
    %c1 = arith.constant 1 : index
    %c0_2 = arith.constant 0 : index
    %4 = vector.load %arg3[%c1, %c0_2] : memref<10x96xf32, #tpu.memory_space<vmem>>, vector<1x96xf32>
    %c2 = arith.constant 2 : index
    %c0_3 = arith.constant 0 : index
    %5 = vector.load %arg3[%c2, %c0_3] : memref<10x96xf32, #tpu.memory_space<vmem>>, vector<1x32xf32>
    %c3 = arith.constant 3 : index
    %c0_4 = arith.constant 0 : index
    %6 = vector.load %arg3[%c3, %c0_4] : memref<10x96xf32, #tpu.memory_space<vmem>>, vector<1x32xf32>
    %c4 = arith.constant 4 : index
    %c0_5 = arith.constant 0 : index
    %7 = vector.load %arg3[%c4, %c0_5] : memref<10x96xf32, #tpu.memory_space<vmem>>, vector<1x32xf32>
    %c5 = arith.constant 5 : index
    %c0_6 = arith.constant 0 : index
    %8 = vector.load %arg3[%c5, %c0_6] : memref<10x96xf32, #tpu.memory_space<vmem>>, vector<1x32xf32>
    %c6 = arith.constant 6 : index
    %c0_7 = arith.constant 0 : index
    %9 = vector.load %arg3[%c6, %c0_7] : memref<10x96xf32, #tpu.memory_space<vmem>>, vector<1x32xf32>
    %c7 = arith.constant 7 : index
    %c0_8 = arith.constant 0 : index
    %10 = vector.load %arg3[%c7, %c0_8] : memref<10x96xf32, #tpu.memory_space<vmem>>, vector<1x32xf32>
    %c8 = arith.constant 8 : index
    %c0_9 = arith.constant 0 : index
    %11 = vector.load %arg3[%c8, %c0_9] : memref<10x96xf32, #tpu.memory_space<vmem>>, vector<1x32xf32>
    %c0_10 = arith.constant 0 : index
    %c0_11 = arith.constant 0 : index
    %c0_12 = arith.constant 0 : index
    %12 = vector.load %arg1[%c0_10, %c0_11, %c0_12] : memref<1x2x4xf32, #tpu.memory_space<vmem>>, vector<1x2x4xf32>
    %13 = vector.shape_cast %12 : vector<1x2x4xf32> to vector<2x4xf32>
    %c0_13 = arith.constant 0 : index
    %c0_14 = arith.constant 0 : index
    %c0_15 = arith.constant 0 : index
    %14 = vector.load %arg2[%c0_13, %c0_14, %c0_15] : memref<1x1x32xf32, #tpu.memory_space<vmem>>, vector<1x1x32xf32>
    %15 = vector.shape_cast %14 : vector<1x1x32xf32> to vector<1x32xf32>
    %16 = arith.addf %3, %15 : vector<1x32xf32>
    %17 = vector.extract_strided_slice %13 {offsets = [0, 0], sizes = [2, 1], strides = [1, 1]} : vector<2x4xf32> to vector<2x1xf32>
    %c0_16 = arith.constant 0 : index
    %c0_17 = arith.constant 0 : index
    %18 = vector.load %arg4[%c0_16, %c0_17] : memref<4x32xf32, #tpu.memory_space<vmem>>, vector<1x32xf32>
    %19 = vector.broadcast %17 : vector<2x1xf32> to vector<2x32xf32>
    %20 = vector.broadcast %18 : vector<1x32xf32> to vector<2x32xf32>
    %21 = arith.mulf %19, %20 : vector<2x32xf32>
    %22 = vector.broadcast %16 : vector<1x32xf32> to vector<2x32xf32>
    %23 = arith.addf %22, %21 : vector<2x32xf32>
    %24 = vector.extract_strided_slice %13 {offsets = [0, 1], sizes = [2, 1], strides = [1, 1]} : vector<2x4xf32> to vector<2x1xf32>
    %c1_18 = arith.constant 1 : index
    %c0_19 = arith.constant 0 : index
    %25 = vector.load %arg4[%c1_18, %c0_19] : memref<4x32xf32, #tpu.memory_space<vmem>>, vector<1x32xf32>
    %26 = vector.broadcast %24 : vector<2x1xf32> to vector<2x32xf32>
    %27 = vector.broadcast %25 : vector<1x32xf32> to vector<2x32xf32>
    %28 = arith.mulf %26, %27 : vector<2x32xf32>
    %29 = arith.addf %23, %28 : vector<2x32xf32>
    %30 = vector.extract_strided_slice %13 {offsets = [0, 2], sizes = [2, 1], strides = [1, 1]} : vector<2x4xf32> to vector<2x1xf32>
    %c2_20 = arith.constant 2 : index
    %c0_21 = arith.constant 0 : index
    %31 = vector.load %arg4[%c2_20, %c0_21] : memref<4x32xf32, #tpu.memory_space<vmem>>, vector<1x32xf32>
    %32 = vector.broadcast %30 : vector<2x1xf32> to vector<2x32xf32>
    %33 = vector.broadcast %31 : vector<1x32xf32> to vector<2x32xf32>
    %34 = arith.mulf %32, %33 : vector<2x32xf32>
    %35 = arith.addf %29, %34 : vector<2x32xf32>
    %36 = vector.extract_strided_slice %13 {offsets = [0, 3], sizes = [2, 1], strides = [1, 1]} : vector<2x4xf32> to vector<2x1xf32>
    %c3_22 = arith.constant 3 : index
    %c0_23 = arith.constant 0 : index
    %37 = vector.load %arg4[%c3_22, %c0_23] : memref<4x32xf32, #tpu.memory_space<vmem>>, vector<1x32xf32>
    %38 = vector.broadcast %36 : vector<2x1xf32> to vector<2x32xf32>
    %39 = vector.broadcast %37 : vector<1x32xf32> to vector<2x32xf32>
    %40 = arith.mulf %38, %39 : vector<2x32xf32>
    %41 = arith.addf %35, %40 : vector<2x32xf32>
    %c0_24 = arith.constant 0 : index
    %c0_25 = arith.constant 0 : index
    %42 = vector.load %arg5[%c0_24, %c0_25] : memref<32x96xf32, #tpu.memory_space<vmem>>, vector<32x96xf32>
    %cst = arith.constant dense<0.000000e+00> : vector<2x96xf32>
    %43 = tpu.matmul %41, %42, %cst {dimension_numbers = #tpu.dot_dimension_numbers<[1], [0], [0], [1], [0, 0, 1, 1], [], []>} : vector<2x32xf32>, vector<32x96xf32>, vector<2x96xf32> -> vector<2x96xf32>
    %44 = vector.broadcast %4 : vector<1x96xf32> to vector<2x96xf32>
    %45 = arith.addf %43, %44 : vector<2x96xf32>
    %cst_26 = arith.constant 0.000000e+00 : f32
    %46 = vector.broadcast %cst_26 : f32 to vector<2x32xf32>
    %47 = vector.extract_strided_slice %45 {offsets = [0, 0], sizes = [2, 8], strides = [1, 1]} : vector<2x96xf32> to vector<2x8xf32>
    %48 = vector.extract_strided_slice %45 {offsets = [0, 32], sizes = [2, 8], strides = [1, 1]} : vector<2x96xf32> to vector<2x8xf32>
    %49 = vector.extract_strided_slice %45 {offsets = [0, 64], sizes = [2, 8], strides = [1, 1]} : vector<2x96xf32> to vector<2x8xf32>
    %cst_27 = arith.constant dense<0.000000e+00> : vector<2x2xf32>
    %50 = tpu.matmul %47, %48, %cst_27 {dimension_numbers = #tpu.dot_dimension_numbers<[1], [1], [0], [0], [0, 0, 1, 0], [], []>} : vector<2x8xf32>, vector<2x8xf32>, vector<2x2xf32> -> vector<2x2xf32>
    %cst_28 = arith.constant 0.353553385 : f32
    %51 = vector.broadcast %cst_28 : f32 to vector<2x2xf32>
    %52 = arith.mulf %50, %51 : vector<2x2xf32>
    %cst_29 = arith.constant dense<0xFF800000> : vector<2xf32>
    %53 = vector.multi_reduction <maximumf>, %52, %cst_29 [1] : vector<2x2xf32> to vector<2xf32>
    %54 = vector.shape_cast %53 : vector<2xf32> to vector<2x1xf32>
    %55 = vector.broadcast %54 : vector<2x1xf32> to vector<2x2xf32>
    %56 = arith.subf %52, %55 : vector<2x2xf32>
    %57 = math.exp %56 : vector<2x2xf32>
    %cst_30 = arith.constant dense<0.000000e+00> : vector<2xf32>
    %58 = vector.multi_reduction <add>, %57, %cst_30 [1] : vector<2x2xf32> to vector<2xf32>
    %59 = vector.shape_cast %58 : vector<2xf32> to vector<2x1xf32>
    %60 = vector.broadcast %59 : vector<2x1xf32> to vector<2x2xf32>
    %61 = arith.divf %57, %60 : vector<2x2xf32>
    %cst_31 = arith.constant dense<0.000000e+00> : vector<2x8xf32>
    %62 = tpu.matmul %61, %49, %cst_31 {dimension_numbers = #tpu.dot_dimension_numbers<[1], [0], [0], [1], [0, 0, 1, 1], [], []>} : vector<2x2xf32>, vector<2x8xf32>, vector<2x8xf32> -> vector<2x8xf32>
    %c0_32 = arith.constant 0 : index
    %c0_33 = arith.constant 0 : index
    %63 = vector.load %arg6[%c0_32, %c0_33] : memref<32x32xf32, #tpu.memory_space<vmem>>, vector<8x32xf32>
    %cst_34 = arith.constant dense<0.000000e+00> : vector<2x32xf32>
    %64 = tpu.matmul %62, %63, %cst_34 {dimension_numbers = #tpu.dot_dimension_numbers<[1], [0], [0], [1], [0, 0, 1, 1], [], []>} : vector<2x8xf32>, vector<8x32xf32>, vector<2x32xf32> -> vector<2x32xf32>
    %65 = arith.addf %46, %64 : vector<2x32xf32>
    %66 = vector.extract_strided_slice %45 {offsets = [0, 8], sizes = [2, 8], strides = [1, 1]} : vector<2x96xf32> to vector<2x8xf32>
    %67 = vector.extract_strided_slice %45 {offsets = [0, 40], sizes = [2, 8], strides = [1, 1]} : vector<2x96xf32> to vector<2x8xf32>
    %68 = vector.extract_strided_slice %45 {offsets = [0, 72], sizes = [2, 8], strides = [1, 1]} : vector<2x96xf32> to vector<2x8xf32>
    %cst_35 = arith.constant dense<0.000000e+00> : vector<2x2xf32>
    %69 = tpu.matmul %66, %67, %cst_35 {dimension_numbers = #tpu.dot_dimension_numbers<[1], [1], [0], [0], [0, 0, 1, 0], [], []>} : vector<2x8xf32>, vector<2x8xf32>, vector<2x2xf32> -> vector<2x2xf32>
    %cst_36 = arith.constant 0.353553385 : f32
    %70 = vector.broadcast %cst_36 : f32 to vector<2x2xf32>
    %71 = arith.mulf %69, %70 : vector<2x2xf32>
    %cst_37 = arith.constant dense<0xFF800000> : vector<2xf32>
    %72 = vector.multi_reduction <maximumf>, %71, %cst_37 [1] : vector<2x2xf32> to vector<2xf32>
    %73 = vector.shape_cast %72 : vector<2xf32> to vector<2x1xf32>
    %74 = vector.broadcast %73 : vector<2x1xf32> to vector<2x2xf32>
    %75 = arith.subf %71, %74 : vector<2x2xf32>
    %76 = math.exp %75 : vector<2x2xf32>
    %cst_38 = arith.constant dense<0.000000e+00> : vector<2xf32>
    %77 = vector.multi_reduction <add>, %76, %cst_38 [1] : vector<2x2xf32> to vector<2xf32>
    %78 = vector.shape_cast %77 : vector<2xf32> to vector<2x1xf32>
    %79 = vector.broadcast %78 : vector<2x1xf32> to vector<2x2xf32>
    %80 = arith.divf %76, %79 : vector<2x2xf32>
    %cst_39 = arith.constant dense<0.000000e+00> : vector<2x8xf32>
    %81 = tpu.matmul %80, %68, %cst_39 {dimension_numbers = #tpu.dot_dimension_numbers<[1], [0], [0], [1], [0, 0, 1, 1], [], []>} : vector<2x2xf32>, vector<2x8xf32>, vector<2x8xf32> -> vector<2x8xf32>
    %c8_40 = arith.constant 8 : index
    %c0_41 = arith.constant 0 : index
    %82 = vector.load %arg6[%c8_40, %c0_41] : memref<32x32xf32, #tpu.memory_space<vmem>>, vector<8x32xf32>
    %cst_42 = arith.constant dense<0.000000e+00> : vector<2x32xf32>
    %83 = tpu.matmul %81, %82, %cst_42 {dimension_numbers = #tpu.dot_dimension_numbers<[1], [0], [0], [1], [0, 0, 1, 1], [], []>} : vector<2x8xf32>, vector<8x32xf32>, vector<2x32xf32> -> vector<2x32xf32>
    %84 = arith.addf %65, %83 : vector<2x32xf32>
    %85 = vector.extract_strided_slice %45 {offsets = [0, 16], sizes = [2, 8], strides = [1, 1]} : vector<2x96xf32> to vector<2x8xf32>
    %86 = vector.extract_strided_slice %45 {offsets = [0, 48], sizes = [2, 8], strides = [1, 1]} : vector<2x96xf32> to vector<2x8xf32>
    %87 = vector.extract_strided_slice %45 {offsets = [0, 80], sizes = [2, 8], strides = [1, 1]} : vector<2x96xf32> to vector<2x8xf32>
    %cst_43 = arith.constant dense<0.000000e+00> : vector<2x2xf32>
    %88 = tpu.matmul %85, %86, %cst_43 {dimension_numbers = #tpu.dot_dimension_numbers<[1], [1], [0], [0], [0, 0, 1, 0], [], []>} : vector<2x8xf32>, vector<2x8xf32>, vector<2x2xf32> -> vector<2x2xf32>
    %cst_44 = arith.constant 0.353553385 : f32
    %89 = vector.broadcast %cst_44 : f32 to vector<2x2xf32>
    %90 = arith.mulf %88, %89 : vector<2x2xf32>
    %cst_45 = arith.constant dense<0xFF800000> : vector<2xf32>
    %91 = vector.multi_reduction <maximumf>, %90, %cst_45 [1] : vector<2x2xf32> to vector<2xf32>
    %92 = vector.shape_cast %91 : vector<2xf32> to vector<2x1xf32>
    %93 = vector.broadcast %92 : vector<2x1xf32> to vector<2x2xf32>
    %94 = arith.subf %90, %93 : vector<2x2xf32>
    %95 = math.exp %94 : vector<2x2xf32>
    %cst_46 = arith.constant dense<0.000000e+00> : vector<2xf32>
    %96 = vector.multi_reduction <add>, %95, %cst_46 [1] : vector<2x2xf32> to vector<2xf32>
    %97 = vector.shape_cast %96 : vector<2xf32> to vector<2x1xf32>
    %98 = vector.broadcast %97 : vector<2x1xf32> to vector<2x2xf32>
    %99 = arith.divf %95, %98 : vector<2x2xf32>
    %cst_47 = arith.constant dense<0.000000e+00> : vector<2x8xf32>
    %100 = tpu.matmul %99, %87, %cst_47 {dimension_numbers = #tpu.dot_dimension_numbers<[1], [0], [0], [1], [0, 0, 1, 1], [], []>} : vector<2x2xf32>, vector<2x8xf32>, vector<2x8xf32> -> vector<2x8xf32>
    %c16 = arith.constant 16 : index
    %c0_48 = arith.constant 0 : index
    %101 = vector.load %arg6[%c16, %c0_48] : memref<32x32xf32, #tpu.memory_space<vmem>>, vector<8x32xf32>
    %cst_49 = arith.constant dense<0.000000e+00> : vector<2x32xf32>
    %102 = tpu.matmul %100, %101, %cst_49 {dimension_numbers = #tpu.dot_dimension_numbers<[1], [0], [0], [1], [0, 0, 1, 1], [], []>} : vector<2x8xf32>, vector<8x32xf32>, vector<2x32xf32> -> vector<2x32xf32>
    %103 = arith.addf %84, %102 : vector<2x32xf32>
    %104 = vector.extract_strided_slice %45 {offsets = [0, 24], sizes = [2, 8], strides = [1, 1]} : vector<2x96xf32> to vector<2x8xf32>
    %105 = vector.extract_strided_slice %45 {offsets = [0, 56], sizes = [2, 8], strides = [1, 1]} : vector<2x96xf32> to vector<2x8xf32>
    %106 = vector.extract_strided_slice %45 {offsets = [0, 88], sizes = [2, 8], strides = [1, 1]} : vector<2x96xf32> to vector<2x8xf32>
    %cst_50 = arith.constant dense<0.000000e+00> : vector<2x2xf32>
    %107 = tpu.matmul %104, %105, %cst_50 {dimension_numbers = #tpu.dot_dimension_numbers<[1], [1], [0], [0], [0, 0, 1, 0], [], []>} : vector<2x8xf32>, vector<2x8xf32>, vector<2x2xf32> -> vector<2x2xf32>
    %cst_51 = arith.constant 0.353553385 : f32
    %108 = vector.broadcast %cst_51 : f32 to vector<2x2xf32>
    %109 = arith.mulf %107, %108 : vector<2x2xf32>
    %cst_52 = arith.constant dense<0xFF800000> : vector<2xf32>
    %110 = vector.multi_reduction <maximumf>, %109, %cst_52 [1] : vector<2x2xf32> to vector<2xf32>
    %111 = vector.shape_cast %110 : vector<2xf32> to vector<2x1xf32>
    %112 = vector.broadcast %111 : vector<2x1xf32> to vector<2x2xf32>
    %113 = arith.subf %109, %112 : vector<2x2xf32>
    %114 = math.exp %113 : vector<2x2xf32>
    %cst_53 = arith.constant dense<0.000000e+00> : vector<2xf32>
    %115 = vector.multi_reduction <add>, %114, %cst_53 [1] : vector<2x2xf32> to vector<2xf32>
    %116 = vector.shape_cast %115 : vector<2xf32> to vector<2x1xf32>
    %117 = vector.broadcast %116 : vector<2x1xf32> to vector<2x2xf32>
    %118 = arith.divf %114, %117 : vector<2x2xf32>
    %cst_54 = arith.constant dense<0.000000e+00> : vector<2x8xf32>
    %119 = tpu.matmul %118, %106, %cst_54 {dimension_numbers = #tpu.dot_dimension_numbers<[1], [0], [0], [1], [0, 0, 1, 1], [], []>} : vector<2x2xf32>, vector<2x8xf32>, vector<2x8xf32> -> vector<2x8xf32>
    %c24 = arith.constant 24 : index
    %c0_55 = arith.constant 0 : index
    %120 = vector.load %arg6[%c24, %c0_55] : memref<32x32xf32, #tpu.memory_space<vmem>>, vector<8x32xf32>
    %cst_56 = arith.constant dense<0.000000e+00> : vector<2x32xf32>
    %121 = tpu.matmul %119, %120, %cst_56 {dimension_numbers = #tpu.dot_dimension_numbers<[1], [0], [0], [1], [0, 0, 1, 1], [], []>} : vector<2x8xf32>, vector<8x32xf32>, vector<2x32xf32> -> vector<2x32xf32>
    %122 = arith.addf %103, %121 : vector<2x32xf32>
    %123 = vector.broadcast %5 : vector<1x32xf32> to vector<2x32xf32>
    %124 = arith.addf %122, %123 : vector<2x32xf32>
    %125 = arith.addf %41, %124 : vector<2x32xf32>
    %cst_57 = arith.constant dense<0.000000e+00> : vector<2xf32>
    %126 = vector.multi_reduction <add>, %125, %cst_57 [1] : vector<2x32xf32> to vector<2xf32>
    %127 = vector.shape_cast %126 : vector<2xf32> to vector<2x1xf32>
    %cst_58 = arith.constant 3.200000e+01 : f32
    %128 = vector.broadcast %cst_58 : f32 to vector<2x1xf32>
    %129 = arith.divf %127, %128 : vector<2x1xf32>
    %130 = vector.broadcast %129 : vector<2x1xf32> to vector<2x32xf32>
    %131 = arith.subf %125, %130 : vector<2x32xf32>
    %132 = arith.mulf %131, %131 : vector<2x32xf32>
    %cst_59 = arith.constant dense<0.000000e+00> : vector<2xf32>
    %133 = vector.multi_reduction <add>, %132, %cst_59 [1] : vector<2x32xf32> to vector<2xf32>
    %134 = vector.shape_cast %133 : vector<2xf32> to vector<2x1xf32>
    %cst_60 = arith.constant 3.200000e+01 : f32
    %135 = vector.broadcast %cst_60 : f32 to vector<2x1xf32>
    %136 = arith.divf %134, %135 : vector<2x1xf32>
    %cst_61 = arith.constant 9.99999974E-6 : f32
    %137 = vector.broadcast %cst_61 : f32 to vector<2x1xf32>
    %138 = arith.addf %136, %137 : vector<2x1xf32>
    %139 = math.rsqrt %138 : vector<2x1xf32>
    %140 = vector.broadcast %139 : vector<2x1xf32> to vector<2x32xf32>
    %141 = arith.mulf %131, %140 : vector<2x32xf32>
    %142 = vector.broadcast %6 : vector<1x32xf32> to vector<2x32xf32>
    %143 = arith.mulf %141, %142 : vector<2x32xf32>
    %144 = vector.broadcast %7 : vector<1x32xf32> to vector<2x32xf32>
    %145 = arith.addf %143, %144 : vector<2x32xf32>
    %c0_62 = arith.constant 0 : index
    %c0_63 = arith.constant 0 : index
    %146 = vector.load %arg7[%c0_62, %c0_63] : memref<32x32xf32, #tpu.memory_space<vmem>>, vector<32x32xf32>
    %cst_64 = arith.constant dense<0.000000e+00> : vector<2x32xf32>
    %147 = tpu.matmul %145, %146, %cst_64 {dimension_numbers = #tpu.dot_dimension_numbers<[1], [0], [0], [1], [0, 0, 1, 1], [], []>} : vector<2x32xf32>, vector<32x32xf32>, vector<2x32xf32> -> vector<2x32xf32>
    %148 = vector.broadcast %8 : vector<1x32xf32> to vector<2x32xf32>
    %149 = arith.addf %147, %148 : vector<2x32xf32>
    %cst_65 = arith.constant 0.000000e+00 : f32
    %150 = vector.broadcast %cst_65 : f32 to vector<2x32xf32>
    %151 = arith.maximumf %149, %150 : vector<2x32xf32>
    %c0_66 = arith.constant 0 : index
    %c0_67 = arith.constant 0 : index
    %152 = vector.load %arg8[%c0_66, %c0_67] : memref<32x32xf32, #tpu.memory_space<vmem>>, vector<32x32xf32>
    %cst_68 = arith.constant dense<0.000000e+00> : vector<2x32xf32>
    %153 = tpu.matmul %151, %152, %cst_68 {dimension_numbers = #tpu.dot_dimension_numbers<[1], [0], [0], [1], [0, 0, 1, 1], [], []>} : vector<2x32xf32>, vector<32x32xf32>, vector<2x32xf32> -> vector<2x32xf32>
    %154 = vector.broadcast %9 : vector<1x32xf32> to vector<2x32xf32>
    %155 = arith.addf %153, %154 : vector<2x32xf32>
    %156 = arith.addf %145, %155 : vector<2x32xf32>
    %cst_69 = arith.constant dense<0.000000e+00> : vector<2xf32>
    %157 = vector.multi_reduction <add>, %156, %cst_69 [1] : vector<2x32xf32> to vector<2xf32>
    %158 = vector.shape_cast %157 : vector<2xf32> to vector<2x1xf32>
    %cst_70 = arith.constant 3.200000e+01 : f32
    %159 = vector.broadcast %cst_70 : f32 to vector<2x1xf32>
    %160 = arith.divf %158, %159 : vector<2x1xf32>
    %161 = vector.broadcast %160 : vector<2x1xf32> to vector<2x32xf32>
    %162 = arith.subf %156, %161 : vector<2x32xf32>
    %163 = arith.mulf %162, %162 : vector<2x32xf32>
    %cst_71 = arith.constant dense<0.000000e+00> : vector<2xf32>
    %164 = vector.multi_reduction <add>, %163, %cst_71 [1] : vector<2x32xf32> to vector<2xf32>
    %165 = vector.shape_cast %164 : vector<2xf32> to vector<2x1xf32>
    %cst_72 = arith.constant 3.200000e+01 : f32
    %166 = vector.broadcast %cst_72 : f32 to vector<2x1xf32>
    %167 = arith.divf %165, %166 : vector<2x1xf32>
    %cst_73 = arith.constant 9.99999974E-6 : f32
    %168 = vector.broadcast %cst_73 : f32 to vector<2x1xf32>
    %169 = arith.addf %167, %168 : vector<2x1xf32>
    %170 = math.rsqrt %169 : vector<2x1xf32>
    %171 = vector.broadcast %170 : vector<2x1xf32> to vector<2x32xf32>
    %172 = arith.mulf %162, %171 : vector<2x32xf32>
    %173 = vector.broadcast %10 : vector<1x32xf32> to vector<2x32xf32>
    %174 = arith.mulf %172, %173 : vector<2x32xf32>
    %175 = vector.broadcast %11 : vector<1x32xf32> to vector<2x32xf32>
    %176 = arith.addf %174, %175 : vector<2x32xf32>
    %c0_74 = arith.constant 0 : index
    %c0_75 = arith.constant 0 : index
    %177 = vector.load %arg11[%c0_74, %c0_75] : memref<2x2xf32, #tpu.memory_space<vmem>>, vector<2x2xf32>
    %c0_76 = arith.constant 0 : index
    %c0_77 = arith.constant 0 : index
    %c0_78 = arith.constant 0 : index
    %178 = vector.load %arg9[%c0_76, %c0_77, %c0_78] : memref<1x32x2xf32, #tpu.memory_space<vmem>>, vector<1x32x2xf32>
    %179 = vector.shape_cast %178 : vector<1x32x2xf32> to vector<32x2xf32>
    %cst_79 = arith.constant dense<0.000000e+00> : vector<2x2xf32>
    %180 = tpu.matmul %176, %179, %cst_79 {dimension_numbers = #tpu.dot_dimension_numbers<[1], [0], [0], [1], [0, 0, 1, 1], [], []>} : vector<2x32xf32>, vector<32x2xf32>, vector<2x2xf32> -> vector<2x2xf32>
    %181 = arith.addf %177, %180 : vector<2x2xf32>
    %c0_80 = arith.constant 0 : index
    %c0_81 = arith.constant 0 : index
    %182 = vector.load %arg11[%c0_80, %c0_81] : memref<2x2xf32, #tpu.memory_space<vmem>>, vector<2x2xf32>
    tpu.vector_store %arg11[%c0_80, %c0_81], %181 {strides = array<i32>} : memref<2x2xf32, #tpu.memory_space<vmem>>, vector<2x2xf32>,
    %c7_i32 = arith.constant 7 : i32
    %183 = arith.cmpi eq, %arg0, %c7_i32 : i32
    %184 = arith.extui %183 : i1 to i32
    %c0_i32_82 = arith.constant 0 : i32
    %185 = arith.cmpi ne, %184, %c0_i32_82 : i32
    scf.if %185 {
      %c0_83 = arith.constant 0 : index
      %c0_84 = arith.constant 0 : index
      %186 = vector.load %arg11[%c0_83, %c0_84] : memref<2x2xf32, #tpu.memory_space<vmem>>, vector<2x2xf32>
      %c9 = arith.constant 9 : index
      %c0_85 = arith.constant 0 : index
      %187 = vector.load %arg3[%c9, %c0_85] : memref<10x96xf32, #tpu.memory_space<vmem>>, vector<1x2xf32>
      %188 = vector.broadcast %187 : vector<1x2xf32> to vector<2x2xf32>
      %189 = arith.addf %186, %188 : vector<2x2xf32>
      %cst_86 = arith.constant dense<0xFF800000> : vector<2xf32>
      %190 = vector.multi_reduction <maximumf>, %189, %cst_86 [1] : vector<2x2xf32> to vector<2xf32>
      %191 = vector.shape_cast %190 : vector<2xf32> to vector<2x1xf32>
      %192 = vector.broadcast %191 : vector<2x1xf32> to vector<2x2xf32>
      %193 = arith.subf %189, %192 : vector<2x2xf32>
      %194 = math.exp %193 : vector<2x2xf32>
      %cst_87 = arith.constant dense<0.000000e+00> : vector<2xf32>
      %195 = vector.multi_reduction <add>, %194, %cst_87 [1] : vector<2x2xf32> to vector<2xf32>
      %196 = vector.shape_cast %195 : vector<2xf32> to vector<2x1xf32>
      %197 = math.log %196 : vector<2x1xf32>
      %198 = vector.broadcast %197 : vector<2x1xf32> to vector<2x2xf32>
      %199 = arith.subf %193, %198 : vector<2x2xf32>
      %c0_88 = arith.constant 0 : index
      %c0_89 = arith.constant 0 : index
      %200 = vector.load %arg10[%c0_88, %c0_89] : memref<2x2xf32, #tpu.memory_space<vmem>>, vector<2x2xf32>
      tpu.vector_store %arg10[%c0_88, %c0_89], %199 {strides = array<i32>} : memref<2x2xf32, #tpu.memory_space<vmem>>, vector<2x2xf32>,
    } else {
    }
    return
  }
  func.func @transform_0(%arg0: i32) -> (i32, i32, i32) {
    %c0_i32 = arith.constant 0 : i32
    %c0_i32_0 = arith.constant 0 : i32
    %c0_i32_1 = arith.constant 0 : i32
    return %arg0, %c0_i32, %c0_i32_0 : i32, i32, i32
  }
  func.func @transform_1(%arg0: i32) -> (i32, i32, i32) {
    %c0_i32 = arith.constant 0 : i32
    %c0_i32_0 = arith.constant 0 : i32
    %c0_i32_1 = arith.constant 0 : i32
    return %arg0, %c0_i32, %c0_i32_0 : i32, i32, i32
  }
  func.func @transform_2(%arg0: i32) -> (i32, i32) {
    %c0_i32 = arith.constant 0 : i32
    %c0_i32_0 = arith.constant 0 : i32
    %c0_i32_1 = arith.constant 0 : i32
    return %c0_i32, %c0_i32_0 : i32, i32
  }
  func.func @transform_3(%arg0: i32) -> (i32, i32) {
    %c0_i32 = arith.constant 0 : i32
    %c0_i32_0 = arith.constant 0 : i32
    %c0_i32_1 = arith.constant 0 : i32
    return %c0_i32, %c0_i32_0 : i32, i32
  }
  func.func @transform_4(%arg0: i32) -> (i32, i32) {
    %c0_i32 = arith.constant 0 : i32
    %c0_i32_0 = arith.constant 0 : i32
    %c0_i32_1 = arith.constant 0 : i32
    return %c0_i32, %c0_i32_0 : i32, i32
  }
  func.func @transform_5(%arg0: i32) -> (i32, i32) {
    %c0_i32 = arith.constant 0 : i32
    %c0_i32_0 = arith.constant 0 : i32
    %c0_i32_1 = arith.constant 0 : i32
    return %c0_i32, %c0_i32_0 : i32, i32
  }
  func.func @transform_6(%arg0: i32) -> (i32, i32) {
    %c0_i32 = arith.constant 0 : i32
    %c0_i32_0 = arith.constant 0 : i32
    %c0_i32_1 = arith.constant 0 : i32
    return %c0_i32, %c0_i32_0 : i32, i32
  }
  func.func @transform_7(%arg0: i32) -> (i32, i32) {
    %c0_i32 = arith.constant 0 : i32
    %c0_i32_0 = arith.constant 0 : i32
    %c0_i32_1 = arith.constant 0 : i32
    return %c0_i32, %c0_i32_0 : i32, i32
  }
  func.func @transform_8(%arg0: i32) -> (i32, i32, i32) {
    %c0_i32 = arith.constant 0 : i32
    %c0_i32_0 = arith.constant 0 : i32
    %c0_i32_1 = arith.constant 0 : i32
    return %arg0, %c0_i32, %c0_i32_0 : i32, i32, i32
  }
  func.func @transform_9(%arg0: i32) -> (i32, i32) {
    %c0_i32 = arith.constant 0 : i32
    %c0_i32_0 = arith.constant 0 : i32
    %c0_i32_1 = arith.constant 0 : i32
    return %c0_i32, %c0_i32_0 : i32, i32
  }
}

</mosaic_0001>

<llo_original>
// kernel: tfeq_conv_forward.1
$region0: #{tfeq_conv_forward.1}
  #allocation0 [shape = 'u32[]', space=smem, size = 0x4, offset = 0x4, fixed_abs, tag = 'smem constant byte address 0x4 - core index']
  #allocation1 [shape = 'u32[144,128]{1,0:T(1,128)}', space=vmem, size = 0x12000, scoped, tag = 'internal scratch']
  #allocation2 [shape = 'f32[2,2]{1,0:T(2,128)}', space=vmem, size = 0x400, scoped, tag = 'scratch operand']
  %s0 = inlined_call_operand.vmem [shape: f32[8,2,4], index: 0, kind: input, shape index: {}]
  %s1 = inlined_call_operand.vmem [shape: f32[8,1,32], index: 1, kind: input, shape index: {}]
  %s2 = inlined_call_operand.vmem [shape: f32[10,96], index: 2, kind: input, shape index: {}]
  %s3 = inlined_call_operand.vmem [shape: f32[4,32], index: 3, kind: input, shape index: {}]
  %s4 = inlined_call_operand.vmem [shape: f32[32,96], index: 4, kind: input, shape index: {}]
  %s5 = inlined_call_operand.vmem [shape: f32[32,32], index: 5, kind: input, shape index: {}]
  %s6 = inlined_call_operand.vmem [shape: f32[32,32], index: 6, kind: input, shape index: {}]
  %s7 = inlined_call_operand.vmem [shape: f32[32,32], index: 7, kind: input, shape index: {}]
  %s8 = inlined_call_operand.vmem [shape: f32[8,32,2], index: 8, kind: input, shape index: {}]
  %s9 = inlined_call_operand.hbm [shape: f32[2,2], index: 9, kind: output, shape index: {}]
  %s10 = sld [smem:[#allocation0]]
  $region77: #{tfeq_conv_forward.1} parent=0
    _
  %s12 = ssub.s32 1, %s10
  %s13 = scalar_select 0, %s12, %s10
  $region1: #{tfeq_conv_forward.1} parent=0
    #allocation3 [shape = 'u8[1024]{0}', space=vmem, size = 0x400, scoped, tag = 'output window, operand 0, single buffered']
    #allocation4 [shape = 's32[2]{0}', space=sflag, size = 0x8, scoped, tag = 'scoped memory for tfeq_conv_forward.1']
    %14 = vsyncpa [#allocation4], 0
    loop: start=0, step=1, limit=10
    $region2: #{tfeq_conv_forward.1} parent=1 // loop_pre_header
      _
    $region3: #{tfeq_conv_forward.1} parent=1 // loop_header
      %s16 = sphi 0, %s20
      %p17 = scmp.ge.s32.totalorder %s16, 10
      %s26 = sphi 0, %s28
      %s29 = sphi 0, %s26
      %s30 = sphi 0, %s29
      %s46 = sphi 0, %s30
      %s52 = sphi 0, %s54
      %s55 = sphi 0, %s52
      %s56 = sphi 0, %s55
      %s72 = sphi 0, %s56
      %s76 = sphi 0, %s76
      %s78 = sphi 0, %s76
      %s79 = sphi 0, %s78
      %s93 = sphi 0, %s79
      %s97 = sphi 0, %s97
      %s99 = sphi 0, %s97
      %s100 = sphi 0, %s99
      %s114 = sphi 0, %s100
      %s118 = sphi 0, %s118
      %s120 = sphi 0, %s118
      %s121 = sphi 0, %s120
      %s135 = sphi 0, %s121
      %s139 = sphi 0, %s139
      %s141 = sphi 0, %s139
      %s142 = sphi 0, %s141
      %s156 = sphi 0, %s142
      %s160 = sphi 0, %s160
      %s162 = sphi 0, %s160
      %s163 = sphi 0, %s162
      %s177 = sphi 0, %s163
      %s181 = sphi 0, %s181
      %s183 = sphi 0, %s181
      %s184 = sphi 0, %s183
      %s198 = sphi 0, %s184
      %s204 = sphi 0, %s206
      %s207 = sphi 0, %s204
      %s208 = sphi 0, %s207
      %s224 = sphi 0, %s208
      %s228 = sphi 0, %s228
      %s230 = sphi 0, %s228
      %s231 = sphi 0, %s230
      %s245 = sphi 0, %s231
    $region4: #{tfeq_conv_forward.1} parent=1 // loop_header_branch
      %19 = sbr.rel (%p17) target = $region8
    $region5: #{tfeq_conv_forward.1} parent=1 // loop_body
      %s21 = ssub.s32 %s16, 1
      %s22 = ssub.s32 %s16, 2
      %s23 = sadd.s32 %s16, 1
      %s24 = ssub.s32 %s16, %s23
      %p25 = scmp.eq.s32.totalorder %s24, 0
      %s27 = sadd.s32 %s26, 1
      %s28 = scalar_select %p25, %s26, %s27
      %p31 = pneg %p25
      %p32 = scmp.eq.s32.totalorder %s16, 7
      %p33 = por %p31, %p32
      %p34 = scmp.ne.s32.totalorder %s26, %s29
      %p35 = scmp.eq.s32.totalorder %s16, 0
      %p36 = por %p34, %p35
      %p37 = scmp.ne.s32.totalorder %s26, %s29
      %p38 = scmp.eq.s32.totalorder %s21, 7
      %p39 = por %p37, %p38
      %p40 = scmp.ne.s32.totalorder %s29, %s30
      %p41 = scmp.eq.s32.totalorder %s21, 0
      %p42 = por %p40, %p41
      %p43 = scmp.ne.s32.totalorder %s29, %s30
      %p44 = scmp.eq.s32.totalorder %s22, 7
      %p45 = por %p43, %p44
      %p47 = scmp.ne.s32.totalorder %s30, %s46
      %p48 = scmp.eq.s32.totalorder %s22, 0
      %p49 = por %p47, %p48
      %s50 = ssub.s32 %s16, %s23
      %p51 = scmp.eq.s32.totalorder %s50, 0
      %s53 = sadd.s32 %s52, 1
      %s54 = scalar_select %p51, %s52, %s53
      %p57 = pneg %p51
      %p58 = scmp.eq.s32.totalorder %s16, 7
      %p59 = por %p57, %p58
      %p60 = scmp.ne.s32.totalorder %s52, %s55
      %p61 = scmp.eq.s32.totalorder %s16, 0
      %p62 = por %p60, %p61
      %p63 = scmp.ne.s32.totalorder %s52, %s55
      %p64 = scmp.eq.s32.totalorder %s21, 7
      %p65 = por %p63, %p64
      %p66 = scmp.ne.s32.totalorder %s55, %s56
      %p67 = scmp.eq.s32.totalorder %s21, 0
      %p68 = por %p66, %p67
      %p69 = scmp.ne.s32.totalorder %s55, %s56
      %p70 = scmp.eq.s32.totalorder %s22, 7
      %p71 = por %p69, %p70
      %p73 = scmp.ne.s32.totalorder %s56, %s72
      %p74 = scmp.eq.s32.totalorder %s22, 0
      %p75 = por %p73, %p74
      %s77 = sadd.s32 %s76, 1
      %p80 = scmp.eq.s32.totalorder %s16, 7
      %p81 = scmp.ne.s32.totalorder %s76, %s78
      %p82 = scmp.eq.s32.totalorder %s16, 0
      %p83 = por %p81, %p82
      %p84 = scmp.ne.s32.totalorder %s76, %s78
      %p85 = scmp.eq.s32.totalorder %s21, 7
      %p86 = por %p84, %p85
      %p87 = scmp.ne.s32.totalorder %s78, %s79
      %p88 = scmp.eq.s32.totalorder %s21, 0
      %p89 = por %p87, %p88
      %p90 = scmp.ne.s32.totalorder %s78, %s79
      %p91 = scmp.eq.s32.totalorder %s22, 7
      %p92 = por %p90, %p91
      %p94 = scmp.ne.s32.totalorder %s79, %s93
      %p95 = scmp.eq.s32.totalorder %s22, 0
      %p96 = por %p94, %p95
      %s98 = sadd.s32 %s97, 1
      %p101 = scmp.eq.s32.totalorder %s16, 7
      %p102 = scmp.ne.s32.totalorder %s97, %s99
      %p103 = scmp.eq.s32.totalorder %s16, 0
      %p104 = por %p102, %p103
      %p105 = scmp.ne.s32.totalorder %s97, %s99
      %p106 = scmp.eq.s32.totalorder %s21, 7
      %p107 = por %p105, %p106
      %p108 = scmp.ne.s32.totalorder %s99, %s100
      %p109 = scmp.eq.s32.totalorder %s21, 0
      %p110 = por %p108, %p109
      %p111 = scmp.ne.s32.totalorder %s99, %s100
      %p112 = scmp.eq.s32.totalorder %s22, 7
      %p113 = por %p111, %p112
      %p115 = scmp.ne.s32.totalorder %s100, %s114
      %p116 = scmp.eq.s32.totalorder %s22, 0
      %p117 = por %p115, %p116
      %s119 = sadd.s32 %s118, 1
      %p122 = scmp.eq.s32.totalorder %s16, 7
      %p123 = scmp.ne.s32.totalorder %s118, %s120
      %p124 = scmp.eq.s32.totalorder %s16, 0
      %p125 = por %p123, %p124
      %p126 = scmp.ne.s32.totalorder %s118, %s120
      %p127 = scmp.eq.s32.totalorder %s21, 7
      %p128 = por %p126, %p127
      %p129 = scmp.ne.s32.totalorder %s120, %s121
      %p130 = scmp.eq.s32.totalorder %s21, 0
      %p131 = por %p129, %p130
      %p132 = scmp.ne.s32.totalorder %s120, %s121
      %p133 = scmp.eq.s32.totalorder %s22, 7
      %p134 = por %p132, %p133
      %p136 = scmp.ne.s32.totalorder %s121, %s135
      %p137 = scmp.eq.s32.totalorder %s22, 0
      %p138 = por %p136, %p137
      %s140 = sadd.s32 %s139, 1
      %p143 = scmp.eq.s32.totalorder %s16, 7
      %p144 = scmp.ne.s32.totalorder %s139, %s141
      %p145 = scmp.eq.s32.totalorder %s16, 0
      %p146 = por %p144, %p145
      %p147 = scmp.ne.s32.totalorder %s139, %s141
      %p148 = scmp.eq.s32.totalorder %s21, 7
      %p149 = por %p147, %p148
      %p150 = scmp.ne.s32.totalorder %s141, %s142
      %p151 = scmp.eq.s32.totalorder %s21, 0
      %p152 = por %p150, %p151
      %p153 = scmp.ne.s32.totalorder %s141, %s142
      %p154 = scmp.eq.s32.totalorder %s22, 7
      %p155 = por %p153, %p154
      %p157 = scmp.ne.s32.totalorder %s142, %s156
      %p158 = scmp.eq.s32.totalorder %s22, 0
      %p159 = por %p157, %p158
      %s161 = sadd.s32 %s160, 1
      %p164 = scmp.eq.s32.totalorder %s16, 7
      %p165 = scmp.ne.s32.totalorder %s160, %s162
      %p166 = scmp.eq.s32.totalorder %s16, 0
      %p167 = por %p165, %p166
      %p168 = scmp.ne.s32.totalorder %s160, %s162
      %p169 = scmp.eq.s32.totalorder %s21, 7
      %p170 = por %p168, %p169
      %p171 = scmp.ne.s32.totalorder %s162, %s163
      %p172 = scmp.eq.s32.totalorder %s21, 0
      %p173 = por %p171, %p172
      %p174 = scmp.ne.s32.totalorder %s162, %s163
      %p175 = scmp.eq.s32.totalorder %s22, 7
      %p176 = por %p174, %p175
      %p178 = scmp.ne.s32.totalorder %s163, %s177
      %p179 = scmp.eq.s32.totalorder %s22, 0
      %p180 = por %p178, %p179
      %s182 = sadd.s32 %s181, 1
      %p185 = scmp.eq.s32.totalorder %s16, 7
      %p186 = scmp.ne.s32.totalorder %s181, %s183
      %p187 = scmp.eq.s32.totalorder %s16, 0
      %p188 = por %p186, %p187
      %p189 = scmp.ne.s32.totalorder %s181, %s183
      %p190 = scmp.eq.s32.totalorder %s21, 7
      %p191 = por %p189, %p190
      %p192 = scmp.ne.s32.totalorder %s183, %s184
      %p193 = scmp.eq.s32.totalorder %s21, 0
      %p194 = por %p192, %p193
      %p195 = scmp.ne.s32.totalorder %s183, %s184
      %p196 = scmp.eq.s32.totalorder %s22, 7
      %p197 = por %p195, %p196
      %p199 = scmp.ne.s32.totalorder %s184, %s198
      %p200 = scmp.eq.s32.totalorder %s22, 0
      %p201 = por %p199, %p200
      %s202 = ssub.s32 %s16, %s23
      %p203 = scmp.eq.s32.totalorder %s202, 0
      %s205 = sadd.s32 %s204, 1
      %s206 = scalar_select %p203, %s204, %s205
      %p209 = pneg %p203
      %p210 = scmp.eq.s32.totalorder %s16, 7
      %p211 = por %p209, %p210
      %p212 = scmp.ne.s32.totalorder %s204, %s207
      %p213 = scmp.eq.s32.totalorder %s16, 0
      %p214 = por %p212, %p213
      %p215 = scmp.ne.s32.totalorder %s204, %s207
      %p216 = scmp.eq.s32.totalorder %s21, 7
      %p217 = por %p215, %p216
      %p218 = scmp.ne.s32.totalorder %s207, %s208
      %p219 = scmp.eq.s32.totalorder %s21, 0
      %p220 = por %p218, %p219
      %p221 = scmp.ne.s32.totalorder %s207, %s208
      %p222 = scmp.eq.s32.totalorder %s22, 7
      %p223 = por %p221, %p222
      %p225 = scmp.ne.s32.totalorder %s208, %s224
      %p226 = scmp.eq.s32.totalorder %s22, 0
      %p227 = por %p225, %p226
      %s229 = sadd.s32 %s228, 1
      %p232 = scmp.eq.s32.totalorder %s16, 7
      %p233 = scmp.ne.s32.totalorder %s228, %s230
      %p234 = scmp.eq.s32.totalorder %s16, 0
      %p235 = por %p233, %p234
      %p236 = scmp.ne.s32.totalorder %s228, %s230
      %p237 = scmp.eq.s32.totalorder %s21, 7
      %p238 = por %p236, %p237
      %p239 = scmp.ne.s32.totalorder %s230, %s231
      %p240 = scmp.eq.s32.totalorder %s21, 0
      %p241 = por %p239, %p240
      %p242 = scmp.ne.s32.totalorder %s230, %s231
      %p243 = scmp.eq.s32.totalorder %s22, 7
      %p244 = por %p242, %p243
      %p246 = scmp.ne.s32.totalorder %s231, %s245
      %p247 = scmp.eq.s32.totalorder %s22, 0
      %p248 = por %p246, %p247
      %p249 = scmp.le.s32.totalorder 1, %s16
      %p250 = scmp.lt.s32.totalorder %s16, 9
      %p251 = pnand %p249, %p250
      %p252 = pneg %p251
      // Predicated region
      $region9: #{tfeq_conv_forward.1} parent=5 // pred_check
        _
      $region10: #{tfeq_conv_forward.1} parent=5 // pred_check_branch
        %254 = sbr.rel (%p251) target = $region12
      $region11: #{tfeq_conv_forward.1} parent=5 // pred_region
        %s255 = ssub.s32 %s16, 1
        // Predicated region
        $region13: #{tfeq_conv_forward.1} parent=11 // pred_check
          %p256 = pneg %p89
        $region14: #{tfeq_conv_forward.1} parent=11 // pred_check_branch
          %258 = sbr.rel (%p256) target = $region16
        $region15: #{tfeq_conv_forward.1} parent=11 // pred_region
          _
        $region16: #{tfeq_conv_forward.1} parent=11 // pred_fallthru
          _
        // Predicated region
        $region17: #{tfeq_conv_forward.1} parent=11 // pred_check
          %p259 = pneg %p110
        $region18: #{tfeq_conv_forward.1} parent=11 // pred_check_branch
          %261 = sbr.rel (%p259) target = $region20
        $region19: #{tfeq_conv_forward.1} parent=11 // pred_region
          _
        $region20: #{tfeq_conv_forward.1} parent=11 // pred_fallthru
          _
        // Predicated region
        $region21: #{tfeq_conv_forward.1} parent=11 // pred_check
          %p262 = pneg %p131
        $region22: #{tfeq_conv_forward.1} parent=11 // pred_check_branch
          %264 = sbr.rel (%p262) target = $region24
        $region23: #{tfeq_conv_forward.1} parent=11 // pred_region
          _
        $region24: #{tfeq_conv_forward.1} parent=11 // pred_fallthru
          _
        // Predicated region
        $region25: #{tfeq_conv_forward.1} parent=11 // pred_check
          %p265 = pneg %p152
        $region26: #{tfeq_conv_forward.1} parent=11 // pred_check_branch
          %267 = sbr.rel (%p265) target = $region28
        $region27: #{tfeq_conv_forward.1} parent=11 // pred_region
          _
        $region28: #{tfeq_conv_forward.1} parent=11 // pred_fallthru
          _
        // Predicated region
        $region29: #{tfeq_conv_forward.1} parent=11 // pred_check
          %p268 = pneg %p173
        $region30: #{tfeq_conv_forward.1} parent=11 // pred_check_branch
          %270 = sbr.rel (%p268) target = $region32
        $region31: #{tfeq_conv_forward.1} parent=11 // pred_region
          _
        $region32: #{tfeq_conv_forward.1} parent=11 // pred_fallthru
          _
        // Predicated region
        $region33: #{tfeq_conv_forward.1} parent=11 // pred_check
          %p271 = pneg %p194
        $region34: #{tfeq_conv_forward.1} parent=11 // pred_check_branch
          %273 = sbr.rel (%p271) target = $region36
        $region35: #{tfeq_conv_forward.1} parent=11 // pred_region
          _
        $region36: #{tfeq_conv_forward.1} parent=11 // pred_fallthru
          _
      $region12: #{tfeq_conv_forward.1} parent=5 // pred_fallthru
        _
      %p274 = scmp.lt.s32.totalorder %s16, 8
      // Predicated region
      $region37: #{tfeq_conv_forward.1} parent=5 // pred_check
        %p275 = pneg %p274
      $region38: #{tfeq_conv_forward.1} parent=5 // pred_check_branch
        %277 = sbr.rel (%p275) target = $region40
      $region39: #{tfeq_conv_forward.1} parent=5 // pred_region
        // Predicated region
        $region41: #{tfeq_conv_forward.1} parent=39 // pred_check
          %p278 = pneg %p36
        $region42: #{tfeq_conv_forward.1} parent=39 // pred_check_branch
          %280 = sbr.rel (%p278) target = $region44
        $region43: #{tfeq_conv_forward.1} parent=39 // pred_region
          %p281 = scmp.lt.s32.totalorder %s16, 7
          %s282 = scalar_select %p281, %s16, 7
          %s283 = smul.addr %s282, 2
          %s284 = scalar_lea.vmem %s0, %s283
        $region44: #{tfeq_conv_forward.1} parent=39 // pred_fallthru
          _
        // Predicated region
        $region45: #{tfeq_conv_forward.1} parent=39 // pred_check
          %p285 = pneg %p62
        $region46: #{tfeq_conv_forward.1} parent=39 // pred_check_branch
          %287 = sbr.rel (%p285) target = $region48
        $region47: #{tfeq_conv_forward.1} parent=39 // pred_region
          %p288 = scmp.lt.s32.totalorder %s16, 7
          %s289 = scalar_select %p288, %s16, 7
          %s290 = scalar_lea.vmem %s1, %s289
        $region48: #{tfeq_conv_forward.1} parent=39 // pred_fallthru
          _
        // Predicated region
        $region49: #{tfeq_conv_forward.1} parent=39 // pred_check
          %p291 = pneg %p214
        $region50: #{tfeq_conv_forward.1} parent=39 // pred_check_branch
          %293 = sbr.rel (%p291) target = $region52
        $region51: #{tfeq_conv_forward.1} parent=39 // pred_region
          %p294 = scmp.lt.s32.totalorder %s16, 7
          %s295 = scalar_select %p294, %s16, 7
          %s296 = smul.addr %s295, 4
          %s297 = smul.addr %s296, 8
          %s298 = scalar_lea.vmem %s8, %s297
        $region52: #{tfeq_conv_forward.1} parent=39 // pred_fallthru
          _
      $region40: #{tfeq_conv_forward.1} parent=5 // pred_fallthru
        _
      %p299 = scmp.le.s32.totalorder 1, %s16
      %p300 = scmp.lt.s32.totalorder %s16, 9
      %p301 = pnand %p299, %p300
      %p302 = pneg %p301
      // Predicated region
      $region53: #{tfeq_conv_forward.1} parent=5 // pred_check
        _
      $region54: #{tfeq_conv_forward.1} parent=5 // pred_check_branch
        %304 = sbr.rel (%p301) target = $region56
      $region55: #{tfeq_conv_forward.1} parent=5 // pred_region
        %s305 = ssub.s32 %s16, 1
        %p306 = scmp.lt.s32.totalorder %s21, 7
        %s307 = scalar_select %p306, %s21, 7
        %s308 = smul.addr %s307, 2
        %s309 = scalar_lea.vmem %s0, %s308
        %p310 = pneg %p42
        %p311 = pneg %p39
        %p312 = scmp.lt.s32.totalorder %s21, 7
        %s313 = scalar_select %p312, %s21, 7
        %s314 = scalar_lea.vmem %s1, %s313
        %p315 = pneg %p68
        %p316 = pneg %p65
        %p317 = pneg %p89
        %p318 = pneg %p86
        %p319 = pneg %p110
        %p320 = pneg %p107
        %p321 = pneg %p131
        %p322 = pneg %p128
        %p323 = pneg %p152
        %p324 = pneg %p149
        %p325 = pneg %p173
        %p326 = pneg %p170
        %p327 = pneg %p194
        %p328 = pneg %p191
        %p329 = scmp.lt.s32.totalorder %s21, 7
        %s330 = scalar_select %p329, %s21, 7
        %s331 = smul.addr %s330, 4
        %s332 = smul.addr %s331, 8
        %s333 = scalar_lea.vmem %s8, %s332
        %p334 = pneg %p220
        %p335 = pneg %p217
        %p336 = pneg %p241
        %p337 = pneg %p238
        %p338 = scmp.lt.s32.totalorder %s21, 7
        %s339 = scalar_select %p338, %s21, 7
        %s340 = smul.addr %s339, 2
        %s341 = scalar_lea.vmem %s0, %s340
        %p342 = scmp.lt.s32.totalorder %s21, 7
        %s343 = scalar_select %p342, %s21, 7
        %s344 = scalar_lea.vmem %s1, %s343
        %p345 = scmp.lt.s32.totalorder %s21, 7
        %s346 = scalar_select %p345, %s21, 7
        %s347 = smul.addr %s346, 4
        %s348 = smul.addr %s347, 8
        %s349 = scalar_lea.vmem %s8, %s348
        %p350 = scmp.eq.s32.totalorder %s21, 0
        // Predicated region
        $region57: #{tfeq_conv_forward.1} parent=55 // pred_check
          %p351 = pneg %p350
        $region58: #{tfeq_conv_forward.1} parent=55 // pred_check_branch
          %353 = sbr.rel (%p351) target = $region60
        $region59: #{tfeq_conv_forward.1} parent=55 // pred_region
          %vm354 = vcmask 9216
          %355 = vst.msk [vmem:[#allocation2] sm:$0x3] %vm354, 0.0
        $region60: #{tfeq_conv_forward.1} parent=55 // pred_fallthru
          _
        %v356 = vld [vmem:[%s2] sm:$0x1]
        %v357 = vld [vmem:[%s2 + $0x1] sm:$0x1]
        %v358 = vld [vmem:[%s2 + $0x2] sm:$0x1]
        %v359 = vld [vmem:[%s2 + $0x3] sm:$0x1]
        %v360 = vld [vmem:[%s2 + $0x4] sm:$0x1]
        %v361 = vld [vmem:[%s2 + $0x5] sm:$0x1]
        %v362 = vld [vmem:[%s2 + $0x6] sm:$0x1]
        %v363 = vld [vmem:[%s2 + $0x7] sm:$0x1]
        %v364 = vld [vmem:[%s2 + $0x8] sm:$0x1]
        %v365 = vld [vmem:[%s341] sm:$0x3]
        %v366 = vld [vmem:[%s344] sm:$0x1]
        %v367 = vadd.f32 %v356, %v366
        %v368 = vld [vmem:[%s3] sm:$0x1]
        %370 = vset.pattern.permute.xlu0 0
        %371 = vperm.xlu0 %370, %v365
        %v372 = vpop.permute.xlu0 %371
        %v374 = vlaneseq
        %v375 = vshrl.u32 %v374, 7
        %v376 = vsub.s32 0, %v375
        %v377 = vrot.slane %v368, %v376
        %v378 = vmul.f32 %v372, %v377
        %v379 = vlaneseq
        %v380 = vshrl.u32 %v379, 7
        %v381 = vsub.s32 0, %v380
        %v382 = vrot.slane %v367, %v381
        %v383 = vadd.f32 %v382, %v378
        %v384 = vld [vmem:[%s3 + $0x1] sm:$0x1]
        %385 = vset.pattern.permute.xlu0 1
        %386 = vperm.xlu0 %385, %v365
        %v387 = vpop.permute.xlu0 %386
        %v389 = vlaneseq
        %v390 = vshrl.u32 %v389, 7
        %v391 = vsub.s32 0, %v390
        %v392 = vrot.slane %v384, %v391
        %v393 = vmul.f32 %v387, %v392
        %v394 = vadd.f32 %v383, %v393
        %v395 = vld [vmem:[%s3 + $0x2] sm:$0x1]
        %396 = vset.pattern.permute.xlu0 2
        %397 = vperm.xlu0 %396, %v365
        %v398 = vpop.permute.xlu0 %397
        %v400 = vlaneseq
        %v401 = vshrl.u32 %v400, 7
        %v402 = vsub.s32 0, %v401
        %v403 = vrot.slane %v395, %v402
        %v404 = vmul.f32 %v398, %v403
        %v405 = vadd.f32 %v394, %v404
        %v406 = vld [vmem:[%s3 + $0x3] sm:$0x1]
        %407 = vset.pattern.permute.xlu0 3
        %408 = vperm.xlu0 %407, %v365
        %v409 = vpop.permute.xlu0 %408
        %v411 = vlaneseq
        %v412 = vshrl.u32 %v411, 7
        %v413 = vsub.s32 0, %v412
        %v414 = vrot.slane %v406, %v413
        %v415 = vmul.f32 %v409, %v414
        %v416 = vadd.f32 %v405, %v415
        %v417 = vld [vmem:[%s4] sm:$0xff]
        %v418 = vld [vmem:[%s4 + $0x8] sm:$0xff]
        %v419 = vld [vmem:[%s4 + $0x10] sm:$0xff]
        %v420 = vld [vmem:[%s4 + $0x18] sm:$0xff]
        %v421 = vlaneseq
        %v422 = vshrl.u32 %v421, 7
        %v423 = vsub.s32 0, %v422
        %v424 = vrot.slane %v357, %v423
        %vm425 = vcmask 261120
        %v427 = vsel %vm425, %v416, 0
        %429 = vmatprep.subr.mxu0 0.0
        %430 = vmatpush1.msra.mxu0 %v417
        %431 = vmatprep.subr.mxu0 0.0
        %432 = vmatpush1.msra.mxu0 %v418
        %433 = vmatprep.subr.mxu0 0.0
        %434 = vmatpush1.msra.mxu0 %v419
        %435 = vmatprep.subr.mxu0 0.0
        %436 = vmatpush1.msra.mxu0 %v420
        %437 = vmatprep.subr.mxu0 0.0
        %438 = vmatpush1.msra.mxu0 0.0
        %439 = vmatprep.subr.mxu0 0.0
        %440 = vmatpush1.msra.mxu0 0.0
        %441 = vmatprep.subr.mxu0 0.0
        %442 = vmatpush1.msra.mxu0 0.0
        %443 = vmatprep.subr.mxu0 0.0
        %444 = vmatpush1.msra.mxu0 0.0
        %445 = vmatprep.subr.mxu0 0.0
        %446 = vmatpush1.msra.mxu0 0.0
        %447 = vmatprep.subr.mxu0 0.0
        %448 = vmatpush1.msra.mxu0 0.0
        %449 = vmatprep.subr.mxu0 0.0
        %450 = vmatpush1.msra.mxu0 0.0
        %451 = vmatprep.subr.mxu0 0.0
        %452 = vmatpush1.msra.mxu0 0.0
        %453 = vmatprep.subr.mxu0 0.0
        %454 = vmatpush1.msra.mxu0 0.0
        %455 = vmatprep.subr.mxu0 0.0
        %456 = vmatpush1.msra.mxu0 0.0
        %457 = vmatprep.subr.mxu0 0.0
        %458 = vmatpush1.msra.mxu0 0.0
        %459 = vmatprep.subr.mxu0 0.0
        %460 = vmatpush1.msra.mxu0 0.0
        %461 = vmatprep.subr.mxu0 0.0
        %462 = vmatpush1.msra.mxu0 0.0
        %463 = vmatprep.subr.mxu0 0.0
        %464 = vmatpush1.msra.mxu0 0.0
        %465 = vmatprep.subr.mxu0 0.0
        %466 = vmatpush1.msra.mxu0 0.0
        %467 = vmatprep.subr.mxu0 0.0
        %468 = vmatpush1.msra.mxu0 0.0
        %469 = vmatprep.subr.mxu0 0.0
        %470 = vmatpush1.msra.mxu0 0.0
        %471 = vmatprep.subr.mxu0 0.0
        %472 = vmatpush1.msra.mxu0 0.0
        %473 = vmatprep.subr.mxu0 0.0
        %474 = vmatpush1.msra.mxu0 0.0
        %475 = vmatprep.subr.mxu0 0.0
        %476 = vmatpush1.msra.mxu0 0.0
        %477 = vmatprep.subr.mxu0 0.0
        %478 = vmatpush1.msra.mxu0 0.0
        %479 = vmatprep.subr.mxu0 0.0
        %480 = vmatpush1.msra.mxu0 0.0
        %481 = vmatprep.subr.mxu0 0.0
        %482 = vmatpush1.msra.mxu0 0.0
        %483 = vmatprep.subr.mxu0 0.0
        %484 = vmatpush1.msra.mxu0 0.0
        %485 = vmatprep.subr.mxu0 0.0
        %486 = vmatpush1.msra.mxu0 0.0
        %487 = vmatprep.subr.mxu0 0.0
        %488 = vmatpush1.msra.mxu0 0.0
        %489 = vmatprep.subr.mxu0 0.0
        %490 = vmatpush1.msra.mxu0 0.0
        %491 = vmatprep.subr.mxu0 0.0
        %492 = vmatpush1.msra.mxu0 0.0
        %493 = vmatprep.mubr.f32.mxu0 0.0
        %494 = vmatmul.mubr.f32.gmra.mrb[0].mxu0 %v427
        %v495 = vpop.f32.mrb[0].mxu0
        %v496 = vadd.f32 %v424, %v495
        %v497 = vpop.f32.mrb[0].mxu0
        %498 = vdwg.mxu0
        %500 = vrot.lane.b32.xlu0 %v496, 96
        %v501 = vpop.permute.xlu0 %500
        %vm502 = vcmask 64512
        %v503 = vsel %vm502, %v496, 0
        %v505 = vsel %vm502, %v501, 0
        %507 = vmatprep.subr.mxu0 0.0
        %508 = vmatpush1.xpose.msra.mxu0 %v505
        %509 = vmatprep.subr.mxu0 0.0
        %510 = vmatpush1.xpose.msra.mxu0 0.0
        %511 = vmatprep.subr.mxu0 0.0
        %512 = vmatpush1.xpose.msra.mxu0 0.0
        %513 = vmatprep.subr.mxu0 0.0
        %514 = vmatpush1.xpose.msra.mxu0 0.0
        %515 = vmatprep.subr.mxu0 0.0
        %516 = vmatpush1.xpose.msra.mxu0 0.0
        %517 = vmatprep.subr.mxu0 0.0
        %518 = vmatpush1.xpose.msra.mxu0 0.0
        %519 = vmatprep.subr.mxu0 0.0
        %520 = vmatpush1.xpose.msra.mxu0 0.0
        %521 = vmatprep.subr.mxu0 0.0
        %522 = vmatpush1.xpose.msra.mxu0 0.0
        %523 = vmatprep.subr.mxu0 0.0
        %524 = vmatpush1.xpose.msra.mxu0 0.0
        %525 = vmatprep.subr.mxu0 0.0
        %526 = vmatpush1.xpose.msra.mxu0 0.0
        %527 = vmatprep.subr.mxu0 0.0
        %528 = vmatpush1.xpose.msra.mxu0 0.0
        %529 = vmatprep.subr.mxu0 0.0
        %530 = vmatpush1.xpose.msra.mxu0 0.0
        %531 = vmatprep.subr.mxu0 0.0
        %532 = vmatpush1.xpose.msra.mxu0 0.0
        %533 = vmatprep.subr.mxu0 0.0
        %534 = vmatpush1.xpose.msra.mxu0 0.0
        %535 = vmatprep.subr.mxu0 0.0
        %536 = vmatpush1.xpose.msra.mxu0 0.0
        %537 = vmatprep.subr.mxu0 0.0
        %538 = vmatpush1.xpose.msra.mxu0 0.0
        %539 = vmatprep.subr.mxu0 0.0
        %540 = vmatpush1.xpose.msra.mxu0 0.0
        %541 = vmatprep.subr.mxu0 0.0
        %542 = vmatpush1.xpose.msra.mxu0 0.0
        %543 = vmatprep.subr.mxu0 0.0
        %544 = vmatpush1.xpose.msra.mxu0 0.0
        %545 = vmatprep.subr.mxu0 0.0
        %546 = vmatpush1.xpose.msra.mxu0 0.0
        %547 = vmatprep.subr.mxu0 0.0
        %548 = vmatpush1.xpose.msra.mxu0 0.0
        %549 = vmatprep.subr.mxu0 0.0
        %550 = vmatpush1.xpose.msra.mxu0 0.0
        %551 = vmatprep.subr.mxu0 0.0
        %552 = vmatpush1.xpose.msra.mxu0 0.0
        %553 = vmatprep.subr.mxu0 0.0
        %554 = vmatpush1.xpose.msra.mxu0 0.0
        %555 = vmatprep.subr.mxu0 0.0
        %556 = vmatpush1.xpose.msra.mxu0 0.0
        %557 = vmatprep.subr.mxu0 0.0
        %558 = vmatpush1.xpose.msra.mxu0 0.0
        %559 = vmatprep.subr.mxu0 0.0
        %560 = vmatpush1.xpose.msra.mxu0 0.0
        %561 = vmatprep.subr.mxu0 0.0
        %562 = vmatpush1.xpose.msra.mxu0 0.0
        %563 = vmatprep.subr.mxu0 0.0
        %564 = vmatpush1.xpose.msra.mxu0 0.0
        %565 = vmatprep.subr.mxu0 0.0
        %566 = vmatpush1.xpose.msra.mxu0 0.0
        %567 = vmatprep.subr.mxu0 0.0
        %568 = vmatpush1.xpose.msra.mxu0 0.0
        %569 = vmatprep.subr.mxu0 0.0
        %570 = vmatpush1.xpose.msra.mxu0 0.0
        %571 = vmatprep.mubr.f32.mxu0 0.0
        %572 = vmatmul.mubr.f32.gmra.mrb[0].mxu0 %v503
        %v573 = vpop.f32.mrb[0].mxu0
        %v574 = vadd.f32 0.0, %v573
        %v575 = vpop.f32.mrb[0].mxu0
        %576 = vdwg.mxu0
        %v577 = vmul.f32 %v574, 0.35355338
        %vm578 = vcmask 9216
        %v579 = vsel %vm578, %v577, -inf
        %580 = vmax.xlane.f32.xlu0 %v579
        %v581 = vpop.xlane.xlu0 %580
        %v582 = vsub.f32 %v577, %v581
        %v583 = vmul.f32 %v582, 1.442695
        %v584 = vpow.pop %v583
        %v585 = vsel %vm578, %v584, 0.0
        %586 = vadd.xlane.f32.xlu0 %v585
        %v587 = vpop.xlane.xlu0 %586
        %v588 = vrcp.pop %v587
        %v589 = vmul.f32 %v584, %v588
        %590 = vrot.lane.b32.xlu0 %v496, 64
        %v591 = vpop.permute.xlu0 %590
        %vm592 = vcmask 15360
        %v594 = vsel %vm592, %v589, 0
        %vm596 = vcmask 1041408
        %v597 = vsel %vm596, %v591, 0
        %599 = vmatprep.subr.mxu0 0.0
        %600 = vmatpush1.msra.mxu0 %v597
        %601 = vmatprep.subr.mxu0 0.0
        %602 = vmatpush1.msra.mxu0 0.0
        %603 = vmatprep.subr.mxu0 0.0
        %604 = vmatpush1.msra.mxu0 0.0
        %605 = vmatprep.subr.mxu0 0.0
        %606 = vmatpush1.msra.mxu0 0.0
        %607 = vmatprep.subr.mxu0 0.0
        %608 = vmatpush1.msra.mxu0 0.0
        %609 = vmatprep.subr.mxu0 0.0
        %610 = vmatpush1.msra.mxu0 0.0
        %611 = vmatprep.subr.mxu0 0.0
        %612 = vmatpush1.msra.mxu0 0.0
        %613 = vmatprep.subr.mxu0 0.0
        %614 = vmatpush1.msra.mxu0 0.0
        %615 = vmatprep.subr.mxu0 0.0
        %616 = vmatpush1.msra.mxu0 0.0
        %617 = vmatprep.subr.mxu0 0.0
        %618 = vmatpush1.msra.mxu0 0.0
        %619 = vmatprep.subr.mxu0 0.0
        %620 = vmatpush1.msra.mxu0 0.0
        %621 = vmatprep.subr.mxu0 0.0
        %622 = vmatpush1.msra.mxu0 0.0
        %623 = vmatprep.subr.mxu0 0.0
        %624 = vmatpush1.msra.mxu0 0.0
        %625 = vmatprep.subr.mxu0 0.0
        %626 = vmatpush1.msra.mxu0 0.0
        %627 = vmatprep.subr.mxu0 0.0
        %628 = vmatpush1.msra.mxu0 0.0
        %629 = vmatprep.subr.mxu0 0.0
        %630 = vmatpush1.msra.mxu0 0.0
        %631 = vmatprep.subr.mxu0 0.0
        %632 = vmatpush1.msra.mxu0 0.0
        %633 = vmatprep.subr.mxu0 0.0
        %634 = vmatpush1.msra.mxu0 0.0
        %635 = vmatprep.subr.mxu0 0.0
        %636 = vmatpush1.msra.mxu0 0.0
        %637 = vmatprep.subr.mxu0 0.0
        %638 = vmatpush1.msra.mxu0 0.0
        %639 = vmatprep.subr.mxu0 0.0
        %640 = vmatpush1.msra.mxu0 0.0
        %641 = vmatprep.subr.mxu0 0.0
        %642 = vmatpush1.msra.mxu0 0.0
        %643 = vmatprep.subr.mxu0 0.0
        %644 = vmatpush1.msra.mxu0 0.0
        %645 = vmatprep.subr.mxu0 0.0
        %646 = vmatpush1.msra.mxu0 0.0
        %647 = vmatprep.subr.mxu0 0.0
        %648 = vmatpush1.msra.mxu0 0.0
        %649 = vmatprep.subr.mxu0 0.0
        %650 = vmatpush1.msra.mxu0 0.0
        %651 = vmatprep.subr.mxu0 0.0
        %652 = vmatpush1.msra.mxu0 0.0
        %653 = vmatprep.subr.mxu0 0.0
        %654 = vmatpush1.msra.mxu0 0.0
        %655 = vmatprep.subr.mxu0 0.0
        %656 = vmatpush1.msra.mxu0 0.0
        %657 = vmatprep.subr.mxu0 0.0
        %658 = vmatpush1.msra.mxu0 0.0
        %659 = vmatprep.subr.mxu0 0.0
        %660 = vmatpush1.msra.mxu0 0.0
        %661 = vmatprep.subr.mxu0 0.0
        %662 = vmatpush1.msra.mxu0 0.0
        %663 = vmatprep.mubr.f32.mxu0 0.0
        %664 = vmatmul.mubr.f32.gmra.mrb[0].mxu0 %v594
        %v665 = vpop.f32.mrb[0].mxu0
        %v666 = vadd.f32 0.0, %v665
        %v667 = vpop.f32.mrb[0].mxu0
        %668 = vdwg.mxu0
        %v669 = vld [vmem:[%s5] sm:$0xff]
        %670 = vrot.lane.b32.xlu0 %v496, 120
        %v671 = vpop.permute.xlu0 %670
        %672 = vrot.lane.b32.xlu0 %v496, 88
        %v673 = vpop.permute.xlu0 %672
        %v674 = vsel %vm502, %v671, 0
        %v676 = vsel %vm502, %v673, 0
        %678 = vmatprep.subr.mxu0 0.0
        %679 = vmatpush1.xpose.msra.mxu0 %v676
        %680 = vmatprep.subr.mxu0 0.0
        %681 = vmatpush1.xpose.msra.mxu0 0.0
        %682 = vmatprep.subr.mxu0 0.0
        %683 = vmatpush1.xpose.msra.mxu0 0.0
        %684 = vmatprep.subr.mxu0 0.0
        %685 = vmatpush1.xpose.msra.mxu0 0.0
        %686 = vmatprep.subr.mxu0 0.0
        %687 = vmatpush1.xpose.msra.mxu0 0.0
        %688 = vmatprep.subr.mxu0 0.0
        %689 = vmatpush1.xpose.msra.mxu0 0.0
        %690 = vmatprep.subr.mxu0 0.0
        %691 = vmatpush1.xpose.msra.mxu0 0.0
        %692 = vmatprep.subr.mxu0 0.0
        %693 = vmatpush1.xpose.msra.mxu0 0.0
        %694 = vmatprep.subr.mxu0 0.0
        %695 = vmatpush1.xpose.msra.mxu0 0.0
        %696 = vmatprep.subr.mxu0 0.0
        %697 = vmatpush1.xpose.msra.mxu0 0.0
        %698 = vmatprep.subr.mxu0 0.0
        %699 = vmatpush1.xpose.msra.mxu0 0.0
        %700 = vmatprep.subr.mxu0 0.0
        %701 = vmatpush1.xpose.msra.mxu0 0.0
        %702 = vmatprep.subr.mxu0 0.0
        %703 = vmatpush1.xpose.msra.mxu0 0.0
        %704 = vmatprep.subr.mxu0 0.0
        %705 = vmatpush1.xpose.msra.mxu0 0.0
        %706 = vmatprep.subr.mxu0 0.0
        %707 = vmatpush1.xpose.msra.mxu0 0.0
        %708 = vmatprep.subr.mxu0 0.0
        %709 = vmatpush1.xpose.msra.mxu0 0.0
        %710 = vmatprep.subr.mxu0 0.0
        %711 = vmatpush1.xpose.msra.mxu0 0.0
        %712 = vmatprep.subr.mxu0 0.0
        %713 = vmatpush1.xpose.msra.mxu0 0.0
        %714 = vmatprep.subr.mxu0 0.0
        %715 = vmatpush1.xpose.msra.mxu0 0.0
        %716 = vmatprep.subr.mxu0 0.0
        %717 = vmatpush1.xpose.msra.mxu0 0.0
        %718 = vmatprep.subr.mxu0 0.0
        %719 = vmatpush1.xpose.msra.mxu0 0.0
        %720 = vmatprep.subr.mxu0 0.0
        %721 = vmatpush1.xpose.msra.mxu0 0.0
        %722 = vmatprep.subr.mxu0 0.0
        %723 = vmatpush1.xpose.msra.mxu0 0.0
        %724 = vmatprep.subr.mxu0 0.0
        %725 = vmatpush1.xpose.msra.mxu0 0.0
        %726 = vmatprep.subr.mxu0 0.0
        %727 = vmatpush1.xpose.msra.mxu0 0.0
        %728 = vmatprep.subr.mxu0 0.0
        %729 = vmatpush1.xpose.msra.mxu0 0.0
        %730 = vmatprep.subr.mxu0 0.0
        %731 = vmatpush1.xpose.msra.mxu0 0.0
        %732 = vmatprep.subr.mxu0 0.0
        %733 = vmatpush1.xpose.msra.mxu0 0.0
        %734 = vmatprep.subr.mxu0 0.0
        %735 = vmatpush1.xpose.msra.mxu0 0.0
        %736 = vmatprep.subr.mxu0 0.0
        %737 = vmatpush1.xpose.msra.mxu0 0.0
        %738 = vmatprep.subr.mxu0 0.0
        %739 = vmatpush1.xpose.msra.mxu0 0.0
        %740 = vmatprep.subr.mxu0 0.0
        %741 = vmatpush1.xpose.msra.mxu0 0.0
        %742 = vmatprep.mubr.f32.mxu0 0.0
        %743 = vmatmul.mubr.f32.gmra.mrb[0].mxu0 %v674
        %v744 = vpop.f32.mrb[0].mxu0
        %v745 = vadd.f32 0.0, %v744
        %v746 = vpop.f32.mrb[0].mxu0
        %747 = vdwg.mxu0
        %v748 = vmul.f32 %v745, 0.35355338
        %v749 = vsel %vm578, %v748, -inf
        %750 = vmax.xlane.f32.xlu0 %v749
        %v751 = vpop.xlane.xlu0 %750
        %v752 = vsub.f32 %v748, %v751
        %v753 = vmul.f32 %v752, 1.442695
        %v754 = vpow.pop %v753
        %v755 = vsel %vm578, %v754, 0.0
        %756 = vadd.xlane.f32.xlu0 %v755
        %v757 = vpop.xlane.xlu0 %756
        %v758 = vrcp.pop %v757
        %v759 = vmul.f32 %v754, %v758
        %760 = vrot.lane.b32.xlu0 %v496, 56
        %v761 = vpop.permute.xlu0 %760
        %v763 = vsel %vm592, %v759, 0
        %v765 = vsel %vm596, %v761, 0
        %767 = vmatprep.subr.mxu0 0.0
        %768 = vmatpush1.msra.mxu0 %v765
        %769 = vmatprep.subr.mxu0 0.0
        %770 = vmatpush1.msra.mxu0 0.0
        %771 = vmatprep.subr.mxu0 0.0
        %772 = vmatpush1.msra.mxu0 0.0
        %773 = vmatprep.subr.mxu0 0.0
        %774 = vmatpush1.msra.mxu0 0.0
        %775 = vmatprep.subr.mxu0 0.0
        %776 = vmatpush1.msra.mxu0 0.0
        %777 = vmatprep.subr.mxu0 0.0
        %778 = vmatpush1.msra.mxu0 0.0
        %779 = vmatprep.subr.mxu0 0.0
        %780 = vmatpush1.msra.mxu0 0.0
        %781 = vmatprep.subr.mxu0 0.0
        %782 = vmatpush1.msra.mxu0 0.0
        %783 = vmatprep.subr.mxu0 0.0
        %784 = vmatpush1.msra.mxu0 0.0
        %785 = vmatprep.subr.mxu0 0.0
        %786 = vmatpush1.msra.mxu0 0.0
        %787 = vmatprep.subr.mxu0 0.0
        %788 = vmatpush1.msra.mxu0 0.0
        %789 = vmatprep.subr.mxu0 0.0
        %790 = vmatpush1.msra.mxu0 0.0
        %791 = vmatprep.subr.mxu0 0.0
        %792 = vmatpush1.msra.mxu0 0.0
        %793 = vmatprep.subr.mxu0 0.0
        %794 = vmatpush1.msra.mxu0 0.0
        %795 = vmatprep.subr.mxu0 0.0
        %796 = vmatpush1.msra.mxu0 0.0
        %797 = vmatprep.subr.mxu0 0.0
        %798 = vmatpush1.msra.mxu0 0.0
        %799 = vmatprep.subr.mxu0 0.0
        %800 = vmatpush1.msra.mxu0 0.0
        %801 = vmatprep.subr.mxu0 0.0
        %802 = vmatpush1.msra.mxu0 0.0
        %803 = vmatprep.subr.mxu0 0.0
        %804 = vmatpush1.msra.mxu0 0.0
        %805 = vmatprep.subr.mxu0 0.0
        %806 = vmatpush1.msra.mxu0 0.0
        %807 = vmatprep.subr.mxu0 0.0
        %808 = vmatpush1.msra.mxu0 0.0
        %809 = vmatprep.subr.mxu0 0.0
        %810 = vmatpush1.msra.mxu0 0.0
        %811 = vmatprep.subr.mxu0 0.0
        %812 = vmatpush1.msra.mxu0 0.0
        %813 = vmatprep.subr.mxu0 0.0
        %814 = vmatpush1.msra.mxu0 0.0
        %815 = vmatprep.subr.mxu0 0.0
        %816 = vmatpush1.msra.mxu0 0.0
        %817 = vmatprep.subr.mxu0 0.0
        %818 = vmatpush1.msra.mxu0 0.0
        %819 = vmatprep.subr.mxu0 0.0
        %820 = vmatpush1.msra.mxu0 0.0
        %821 = vmatprep.subr.mxu0 0.0
        %822 = vmatpush1.msra.mxu0 0.0
        %823 = vmatprep.subr.mxu0 0.0
        %824 = vmatpush1.msra.mxu0 0.0
        %825 = vmatprep.subr.mxu0 0.0
        %826 = vmatpush1.msra.mxu0 0.0
        %827 = vmatprep.subr.mxu0 0.0
        %828 = vmatpush1.msra.mxu0 0.0
        %829 = vmatprep.subr.mxu0 0.0
        %830 = vmatpush1.msra.mxu0 0.0
        %831 = vmatprep.mubr.f32.mxu0 0.0
        %832 = vmatmul.mubr.f32.gmra.mrb[0].mxu0 %v763
        %v833 = vpop.f32.mrb[0].mxu0
        %v834 = vadd.f32 0.0, %v833
        %v835 = vpop.f32.mrb[0].mxu0
        %836 = vdwg.mxu0
        %v837 = vld [vmem:[%s5 + $0x8] sm:$0xff]
        %v839 = vsel %vm502, %v834, 0
        %841 = vmatprep.subr.mxu0 0.0
        %842 = vmatpush1.msra.mxu0 %v837
        %843 = vmatprep.subr.mxu0 0.0
        %844 = vmatpush1.msra.mxu0 0.0
        %845 = vmatprep.subr.mxu0 0.0
        %846 = vmatpush1.msra.mxu0 0.0
        %847 = vmatprep.subr.mxu0 0.0
        %848 = vmatpush1.msra.mxu0 0.0
        %849 = vmatprep.subr.mxu0 0.0
        %850 = vmatpush1.msra.mxu0 0.0
        %851 = vmatprep.subr.mxu0 0.0
        %852 = vmatpush1.msra.mxu0 0.0
        %853 = vmatprep.subr.mxu0 0.0
        %854 = vmatpush1.msra.mxu0 0.0
        %855 = vmatprep.subr.mxu0 0.0
        %856 = vmatpush1.msra.mxu0 0.0
        %857 = vmatprep.subr.mxu0 0.0
        %858 = vmatpush1.msra.mxu0 0.0
        %859 = vmatprep.subr.mxu0 0.0
        %860 = vmatpush1.msra.mxu0 0.0
        %861 = vmatprep.subr.mxu0 0.0
        %862 = vmatpush1.msra.mxu0 0.0
        %863 = vmatprep.subr.mxu0 0.0
        %864 = vmatpush1.msra.mxu0 0.0
        %865 = vmatprep.subr.mxu0 0.0
        %866 = vmatpush1.msra.mxu0 0.0
        %867 = vmatprep.subr.mxu0 0.0
        %868 = vmatpush1.msra.mxu0 0.0
        %869 = vmatprep.subr.mxu0 0.0
        %870 = vmatpush1.msra.mxu0 0.0
        %871 = vmatprep.subr.mxu0 0.0
        %872 = vmatpush1.msra.mxu0 0.0
        %873 = vmatprep.subr.mxu0 0.0
        %874 = vmatpush1.msra.mxu0 0.0
        %875 = vmatprep.subr.mxu0 0.0
        %876 = vmatpush1.msra.mxu0 0.0
        %877 = vmatprep.subr.mxu0 0.0
        %878 = vmatpush1.msra.mxu0 0.0
        %879 = vmatprep.subr.mxu0 0.0
        %880 = vmatpush1.msra.mxu0 0.0
        %881 = vmatprep.subr.mxu0 0.0
        %882 = vmatpush1.msra.mxu0 0.0
        %883 = vmatprep.subr.mxu0 0.0
        %884 = vmatpush1.msra.mxu0 0.0
        %885 = vmatprep.subr.mxu0 0.0
        %886 = vmatpush1.msra.mxu0 0.0
        %887 = vmatprep.subr.mxu0 0.0
        %888 = vmatpush1.msra.mxu0 0.0
        %889 = vmatprep.subr.mxu0 0.0
        %890 = vmatpush1.msra.mxu0 0.0
        %891 = vmatprep.subr.mxu0 0.0
        %892 = vmatpush1.msra.mxu0 0.0
        %893 = vmatprep.subr.mxu0 0.0
        %894 = vmatpush1.msra.mxu0 0.0
        %895 = vmatprep.subr.mxu0 0.0
        %896 = vmatpush1.msra.mxu0 0.0
        %897 = vmatprep.subr.mxu0 0.0
        %898 = vmatpush1.msra.mxu0 0.0
        %899 = vmatprep.subr.mxu0 0.0
        %900 = vmatpush1.msra.mxu0 0.0
        %901 = vmatprep.subr.mxu0 0.0
        %902 = vmatpush1.msra.mxu0 0.0
        %903 = vmatprep.subr.mxu0 0.0
        %904 = vmatpush1.msra.mxu0 0.0
        %905 = vmatprep.mubr.f32.mxu0 0.0
        %906 = vmatmul.mubr.f32.gmra.mrb[0].mxu0 %v839
        %v907 = vpop.f32.mrb[0].mxu0
        %v908 = vadd.f32 0.0, %v907
        %v909 = vpop.f32.mrb[0].mxu0
        %910 = vdwg.mxu0
        %v912 = vsel %vm502, %v666, 0
        %914 = vmatprep.subr.mxu0 0.0
        %915 = vmatpush1.msra.mxu0 %v669
        %916 = vmatprep.subr.mxu0 0.0
        %917 = vmatpush1.msra.mxu0 0.0
        %918 = vmatprep.subr.mxu0 0.0
        %919 = vmatpush1.msra.mxu0 0.0
        %920 = vmatprep.subr.mxu0 0.0
        %921 = vmatpush1.msra.mxu0 0.0
        %922 = vmatprep.subr.mxu0 0.0
        %923 = vmatpush1.msra.mxu0 0.0
        %924 = vmatprep.subr.mxu0 0.0
        %925 = vmatpush1.msra.mxu0 0.0
        %926 = vmatprep.subr.mxu0 0.0
        %927 = vmatpush1.msra.mxu0 0.0
        %928 = vmatprep.subr.mxu0 0.0
        %929 = vmatpush1.msra.mxu0 0.0
        %930 = vmatprep.subr.mxu0 0.0
        %931 = vmatpush1.msra.mxu0 0.0
        %932 = vmatprep.subr.mxu0 0.0
        %933 = vmatpush1.msra.mxu0 0.0
        %934 = vmatprep.subr.mxu0 0.0
        %935 = vmatpush1.msra.mxu0 0.0
        %936 = vmatprep.subr.mxu0 0.0
        %937 = vmatpush1.msra.mxu0 0.0
        %938 = vmatprep.subr.mxu0 0.0
        %939 = vmatpush1.msra.mxu0 0.0
        %940 = vmatprep.subr.mxu0 0.0
        %941 = vmatpush1.msra.mxu0 0.0
        %942 = vmatprep.subr.mxu0 0.0
        %943 = vmatpush1.msra.mxu0 0.0
        %944 = vmatprep.subr.mxu0 0.0
        %945 = vmatpush1.msra.mxu0 0.0
        %946 = vmatprep.subr.mxu0 0.0
        %947 = vmatpush1.msra.mxu0 0.0
        %948 = vmatprep.subr.mxu0 0.0
        %949 = vmatpush1.msra.mxu0 0.0
        %950 = vmatprep.subr.mxu0 0.0
        %951 = vmatpush1.msra.mxu0 0.0
        %952 = vmatprep.subr.mxu0 0.0
        %953 = vmatpush1.msra.mxu0 0.0
        %954 = vmatprep.subr.mxu0 0.0
        %955 = vmatpush1.msra.mxu0 0.0
        %956 = vmatprep.subr.mxu0 0.0
        %957 = vmatpush1.msra.mxu0 0.0
        %958 = vmatprep.subr.mxu0 0.0
        %959 = vmatpush1.msra.mxu0 0.0
        %960 = vmatprep.subr.mxu0 0.0
        %961 = vmatpush1.msra.mxu0 0.0
        %962 = vmatprep.subr.mxu0 0.0
        %963 = vmatpush1.msra.mxu0 0.0
        %964 = vmatprep.subr.mxu0 0.0
        %965 = vmatpush1.msra.mxu0 0.0
        %966 = vmatprep.subr.mxu0 0.0
        %967 = vmatpush1.msra.mxu0 0.0
        %968 = vmatprep.subr.mxu0 0.0
        %969 = vmatpush1.msra.mxu0 0.0
        %970 = vmatprep.subr.mxu0 0.0
        %971 = vmatpush1.msra.mxu0 0.0
        %972 = vmatprep.subr.mxu0 0.0
        %973 = vmatpush1.msra.mxu0 0.0
        %974 = vmatprep.subr.mxu0 0.0
        %975 = vmatpush1.msra.mxu0 0.0
        %976 = vmatprep.subr.mxu0 0.0
        %977 = vmatpush1.msra.mxu0 0.0
        %978 = vmatprep.mubr.f32.mxu0 0.0
        %979 = vmatmul.mubr.f32.gmra.mrb[0].mxu0 %v912
        %v980 = vpop.f32.mrb[0].mxu0
        %v981 = vadd.f32 %v908, %v980
        %v982 = vpop.f32.mrb[0].mxu0
        %983 = vdwg.mxu0
        %984 = vrot.lane.b32.xlu0 %v496, 112
        %v985 = vpop.permute.xlu0 %984
        %986 = vrot.lane.b32.xlu0 %v496, 80
        %v987 = vpop.permute.xlu0 %986
        %v988 = vsel %vm502, %v985, 0
        %v990 = vsel %vm502, %v987, 0
        %992 = vmatprep.subr.mxu0 0.0
        %993 = vmatpush1.xpose.msra.mxu0 %v990
        %994 = vmatprep.subr.mxu0 0.0
        %995 = vmatpush1.xpose.msra.mxu0 0.0
        %996 = vmatprep.subr.mxu0 0.0
        %997 = vmatpush1.xpose.msra.mxu0 0.0
        %998 = vmatprep.subr.mxu0 0.0
        %999 = vmatpush1.xpose.msra.mxu0 0.0
        %1000 = vmatprep.subr.mxu0 0.0
        %1001 = vmatpush1.xpose.msra.mxu0 0.0
        %1002 = vmatprep.subr.mxu0 0.0
        %1003 = vmatpush1.xpose.msra.mxu0 0.0
        %1004 = vmatprep.subr.mxu0 0.0
        %1005 = vmatpush1.xpose.msra.mxu0 0.0
        %1006 = vmatprep.subr.mxu0 0.0
        %1007 = vmatpush1.xpose.msra.mxu0 0.0
        %1008 = vmatprep.subr.mxu0 0.0
        %1009 = vmatpush1.xpose.msra.mxu0 0.0
        %1010 = vmatprep.subr.mxu0 0.0
        %1011 = vmatpush1.xpose.msra.mxu0 0.0
        %1012 = vmatprep.subr.mxu0 0.0
        %1013 = vmatpush1.xpose.msra.mxu0 0.0
        %1014 = vmatprep.subr.mxu0 0.0
        %1015 = vmatpush1.xpose.msra.mxu0 0.0
        %1016 = vmatprep.subr.mxu0 0.0
        %1017 = vmatpush1.xpose.msra.mxu0 0.0
        %1018 = vmatprep.subr.mxu0 0.0
        %1019 = vmatpush1.xpose.msra.mxu0 0.0
        %1020 = vmatprep.subr.mxu0 0.0
        %1021 = vmatpush1.xpose.msra.mxu0 0.0
        %1022 = vmatprep.subr.mxu0 0.0
        %1023 = vmatpush1.xpose.msra.mxu0 0.0
        %1024 = vmatprep.subr.mxu0 0.0
        %1025 = vmatpush1.xpose.msra.mxu0 0.0
        %1026 = vmatprep.subr.mxu0 0.0
        %1027 = vmatpush1.xpose.msra.mxu0 0.0
        %1028 = vmatprep.subr.mxu0 0.0
        %1029 = vmatpush1.xpose.msra.mxu0 0.0
        %1030 = vmatprep.subr.mxu0 0.0
        %1031 = vmatpush1.xpose.msra.mxu0 0.0
        %1032 = vmatprep.subr.mxu0 0.0
        %1033 = vmatpush1.xpose.msra.mxu0 0.0
        %1034 = vmatprep.subr.mxu0 0.0
        %1035 = vmatpush1.xpose.msra.mxu0 0.0
        %1036 = vmatprep.subr.mxu0 0.0
        %1037 = vmatpush1.xpose.msra.mxu0 0.0
        %1038 = vmatprep.subr.mxu0 0.0
        %1039 = vmatpush1.xpose.msra.mxu0 0.0
        %1040 = vmatprep.subr.mxu0 0.0
        %1041 = vmatpush1.xpose.msra.mxu0 0.0
        %1042 = vmatprep.subr.mxu0 0.0
        %1043 = vmatpush1.xpose.msra.mxu0 0.0
        %1044 = vmatprep.subr.mxu0 0.0
        %1045 = vmatpush1.xpose.msra.mxu0 0.0
        %1046 = vmatprep.subr.mxu0 0.0
        %1047 = vmatpush1.xpose.msra.mxu0 0.0
        %1048 = vmatprep.subr.mxu0 0.0
        %1049 = vmatpush1.xpose.msra.mxu0 0.0
        %1050 = vmatprep.subr.mxu0 0.0
        %1051 = vmatpush1.xpose.msra.mxu0 0.0
        %1052 = vmatprep.subr.mxu0 0.0
        %1053 = vmatpush1.xpose.msra.mxu0 0.0
        %1054 = vmatprep.subr.mxu0 0.0
        %1055 = vmatpush1.xpose.msra.mxu0 0.0
        %1056 = vmatprep.mubr.f32.mxu0 0.0
        %1057 = vmatmul.mubr.f32.gmra.mrb[0].mxu0 %v988
        %v1058 = vpop.f32.mrb[0].mxu0
        %v1059 = vadd.f32 0.0, %v1058
        %v1060 = vpop.f32.mrb[0].mxu0
        %1061 = vdwg.mxu0
        %v1062 = vmul.f32 %v1059, 0.35355338
        %v1063 = vsel %vm578, %v1062, -inf
        %1064 = vmax.xlane.f32.xlu0 %v1063
        %v1065 = vpop.xlane.xlu0 %1064
        %v1066 = vsub.f32 %v1062, %v1065
        %v1067 = vmul.f32 %v1066, 1.442695
        %v1068 = vpow.pop %v1067
        %v1069 = vsel %vm578, %v1068, 0.0
        %1070 = vadd.xlane.f32.xlu0 %v1069
        %v1071 = vpop.xlane.xlu0 %1070
        %v1072 = vrcp.pop %v1071
        %v1073 = vmul.f32 %v1068, %v1072
        %1074 = vrot.lane.b32.xlu0 %v496, 48
        %v1075 = vpop.permute.xlu0 %1074
        %v1077 = vsel %vm592, %v1073, 0
        %v1079 = vsel %vm596, %v1075, 0
        %1081 = vmatprep.subr.mxu0 0.0
        %1082 = vmatpush1.msra.mxu0 %v1079
        %1083 = vmatprep.subr.mxu0 0.0
        %1084 = vmatpush1.msra.mxu0 0.0
        %1085 = vmatprep.subr.mxu0 0.0
        %1086 = vmatpush1.msra.mxu0 0.0
        %1087 = vmatprep.subr.mxu0 0.0
        %1088 = vmatpush1.msra.mxu0 0.0
        %1089 = vmatprep.subr.mxu0 0.0
        %1090 = vmatpush1.msra.mxu0 0.0
        %1091 = vmatprep.subr.mxu0 0.0
        %1092 = vmatpush1.msra.mxu0 0.0
        %1093 = vmatprep.subr.mxu0 0.0
        %1094 = vmatpush1.msra.mxu0 0.0
        %1095 = vmatprep.subr.mxu0 0.0
        %1096 = vmatpush1.msra.mxu0 0.0
        %1097 = vmatprep.subr.mxu0 0.0
        %1098 = vmatpush1.msra.mxu0 0.0
        %1099 = vmatprep.subr.mxu0 0.0
        %1100 = vmatpush1.msra.mxu0 0.0
        %1101 = vmatprep.subr.mxu0 0.0
        %1102 = vmatpush1.msra.mxu0 0.0
        %1103 = vmatprep.subr.mxu0 0.0
        %1104 = vmatpush1.msra.mxu0 0.0
        %1105 = vmatprep.subr.mxu0 0.0
        %1106 = vmatpush1.msra.mxu0 0.0
        %1107 = vmatprep.subr.mxu0 0.0
        %1108 = vmatpush1.msra.mxu0 0.0
        %1109 = vmatprep.subr.mxu0 0.0
        %1110 = vmatpush1.msra.mxu0 0.0
        %1111 = vmatprep.subr.mxu0 0.0
        %1112 = vmatpush1.msra.mxu0 0.0
        %1113 = vmatprep.subr.mxu0 0.0
        %1114 = vmatpush1.msra.mxu0 0.0
        %1115 = vmatprep.subr.mxu0 0.0
        %1116 = vmatpush1.msra.mxu0 0.0
        %1117 = vmatprep.subr.mxu0 0.0
        %1118 = vmatpush1.msra.mxu0 0.0
        %1119 = vmatprep.subr.mxu0 0.0
        %1120 = vmatpush1.msra.mxu0 0.0
        %1121 = vmatprep.subr.mxu0 0.0
        %1122 = vmatpush1.msra.mxu0 0.0
        %1123 = vmatprep.subr.mxu0 0.0
        %1124 = vmatpush1.msra.mxu0 0.0
        %1125 = vmatprep.subr.mxu0 0.0
        %1126 = vmatpush1.msra.mxu0 0.0
        %1127 = vmatprep.subr.mxu0 0.0
        %1128 = vmatpush1.msra.mxu0 0.0
        %1129 = vmatprep.subr.mxu0 0.0
        %1130 = vmatpush1.msra.mxu0 0.0
        %1131 = vmatprep.subr.mxu0 0.0
        %1132 = vmatpush1.msra.mxu0 0.0
        %1133 = vmatprep.subr.mxu0 0.0
        %1134 = vmatpush1.msra.mxu0 0.0
        %1135 = vmatprep.subr.mxu0 0.0
        %1136 = vmatpush1.msra.mxu0 0.0
        %1137 = vmatprep.subr.mxu0 0.0
        %1138 = vmatpush1.msra.mxu0 0.0
        %1139 = vmatprep.subr.mxu0 0.0
        %1140 = vmatpush1.msra.mxu0 0.0
        %1141 = vmatprep.subr.mxu0 0.0
        %1142 = vmatpush1.msra.mxu0 0.0
        %1143 = vmatprep.subr.mxu0 0.0
        %1144 = vmatpush1.msra.mxu0 0.0
        %1145 = vmatprep.mubr.f32.mxu0 0.0
        %1146 = vmatmul.mubr.f32.gmra.mrb[0].mxu0 %v1077
        %v1147 = vpop.f32.mrb[0].mxu0
        %v1148 = vadd.f32 0.0, %v1147
        %v1149 = vpop.f32.mrb[0].mxu0
        %1150 = vdwg.mxu0
        %v1151 = vld [vmem:[%s5 + $0x10] sm:$0xff]
        %v1153 = vsel %vm502, %v1148, 0
        %1155 = vmatprep.subr.mxu0 0.0
        %1156 = vmatpush1.msra.mxu0 %v1151
        %1157 = vmatprep.subr.mxu0 0.0
        %1158 = vmatpush1.msra.mxu0 0.0
        %1159 = vmatprep.subr.mxu0 0.0
        %1160 = vmatpush1.msra.mxu0 0.0
        %1161 = vmatprep.subr.mxu0 0.0
        %1162 = vmatpush1.msra.mxu0 0.0
        %1163 = vmatprep.subr.mxu0 0.0
        %1164 = vmatpush1.msra.mxu0 0.0
        %1165 = vmatprep.subr.mxu0 0.0
        %1166 = vmatpush1.msra.mxu0 0.0
        %1167 = vmatprep.subr.mxu0 0.0
        %1168 = vmatpush1.msra.mxu0 0.0
        %1169 = vmatprep.subr.mxu0 0.0
        %1170 = vmatpush1.msra.mxu0 0.0
        %1171 = vmatprep.subr.mxu0 0.0
        %1172 = vmatpush1.msra.mxu0 0.0
        %1173 = vmatprep.subr.mxu0 0.0
        %1174 = vmatpush1.msra.mxu0 0.0
        %1175 = vmatprep.subr.mxu0 0.0
        %1176 = vmatpush1.msra.mxu0 0.0
        %1177 = vmatprep.subr.mxu0 0.0
        %1178 = vmatpush1.msra.mxu0 0.0
        %1179 = vmatprep.subr.mxu0 0.0
        %1180 = vmatpush1.msra.mxu0 0.0
        %1181 = vmatprep.subr.mxu0 0.0
        %1182 = vmatpush1.msra.mxu0 0.0
        %1183 = vmatprep.subr.mxu0 0.0
        %1184 = vmatpush1.msra.mxu0 0.0
        %1185 = vmatprep.subr.mxu0 0.0
        %1186 = vmatpush1.msra.mxu0 0.0
        %1187 = vmatprep.subr.mxu0 0.0
        %1188 = vmatpush1.msra.mxu0 0.0
        %1189 = vmatprep.subr.mxu0 0.0
        %1190 = vmatpush1.msra.mxu0 0.0
        %1191 = vmatprep.subr.mxu0 0.0
        %1192 = vmatpush1.msra.mxu0 0.0
        %1193 = vmatprep.subr.mxu0 0.0
        %1194 = vmatpush1.msra.mxu0 0.0
        %1195 = vmatprep.subr.mxu0 0.0
        %1196 = vmatpush1.msra.mxu0 0.0
        %1197 = vmatprep.subr.mxu0 0.0
        %1198 = vmatpush1.msra.mxu0 0.0
        %1199 = vmatprep.subr.mxu0 0.0
        %1200 = vmatpush1.msra.mxu0 0.0
        %1201 = vmatprep.subr.mxu0 0.0
        %1202 = vmatpush1.msra.mxu0 0.0
        %1203 = vmatprep.subr.mxu0 0.0
        %1204 = vmatpush1.msra.mxu0 0.0
        %1205 = vmatprep.subr.mxu0 0.0
        %1206 = vmatpush1.msra.mxu0 0.0
        %1207 = vmatprep.subr.mxu0 0.0
        %1208 = vmatpush1.msra.mxu0 0.0
        %1209 = vmatprep.subr.mxu0 0.0
        %1210 = vmatpush1.msra.mxu0 0.0
        %1211 = vmatprep.subr.mxu0 0.0
        %1212 = vmatpush1.msra.mxu0 0.0
        %1213 = vmatprep.subr.mxu0 0.0
        %1214 = vmatpush1.msra.mxu0 0.0
        %1215 = vmatprep.subr.mxu0 0.0
        %1216 = vmatpush1.msra.mxu0 0.0
        %1217 = vmatprep.subr.mxu0 0.0
        %1218 = vmatpush1.msra.mxu0 0.0
        %1219 = vmatprep.mubr.f32.mxu0 0.0
        %1220 = vmatmul.mubr.f32.gmra.mrb[0].mxu0 %v1153
        %v1221 = vpop.f32.mrb[0].mxu0
        %v1222 = vadd.f32 0.0, %v1221
        %v1223 = vpop.f32.mrb[0].mxu0
        %1224 = vdwg.mxu0
        %v1225 = vadd.f32 %v981, %v1222
        %1226 = vrot.lane.b32.xlu0 %v496, 104
        %v1227 = vpop.permute.xlu0 %1226
        %1228 = vrot.lane.b32.xlu0 %v496, 72
        %v1229 = vpop.permute.xlu0 %1228
        %v1230 = vsel %vm502, %v1227, 0
        %v1232 = vsel %vm502, %v1229, 0
        %1234 = vmatprep.subr.mxu0 0.0
        %1235 = vmatpush1.xpose.msra.mxu0 %v1232
        %1236 = vmatprep.subr.mxu0 0.0
        %1237 = vmatpush1.xpose.msra.mxu0 0.0
        %1238 = vmatprep.subr.mxu0 0.0
        %1239 = vmatpush1.xpose.msra.mxu0 0.0
        %1240 = vmatprep.subr.mxu0 0.0
        %1241 = vmatpush1.xpose.msra.mxu0 0.0
        %1242 = vmatprep.subr.mxu0 0.0
        %1243 = vmatpush1.xpose.msra.mxu0 0.0
        %1244 = vmatprep.subr.mxu0 0.0
        %1245 = vmatpush1.xpose.msra.mxu0 0.0
        %1246 = vmatprep.subr.mxu0 0.0
        %1247 = vmatpush1.xpose.msra.mxu0 0.0
        %1248 = vmatprep.subr.mxu0 0.0
        %1249 = vmatpush1.xpose.msra.mxu0 0.0
        %1250 = vmatprep.subr.mxu0 0.0
        %1251 = vmatpush1.xpose.msra.mxu0 0.0
        %1252 = vmatprep.subr.mxu0 0.0
        %1253 = vmatpush1.xpose.msra.mxu0 0.0
        %1254 = vmatprep.subr.mxu0 0.0
        %1255 = vmatpush1.xpose.msra.mxu0 0.0
        %1256 = vmatprep.subr.mxu0 0.0
        %1257 = vmatpush1.xpose.msra.mxu0 0.0
        %1258 = vmatprep.subr.mxu0 0.0
        %1259 = vmatpush1.xpose.msra.mxu0 0.0
        %1260 = vmatprep.subr.mxu0 0.0
        %1261 = vmatpush1.xpose.msra.mxu0 0.0
        %1262 = vmatprep.subr.mxu0 0.0
        %1263 = vmatpush1.xpose.msra.mxu0 0.0
        %1264 = vmatprep.subr.mxu0 0.0
        %1265 = vmatpush1.xpose.msra.mxu0 0.0
        %1266 = vmatprep.subr.mxu0 0.0
        %1267 = vmatpush1.xpose.msra.mxu0 0.0
        %1268 = vmatprep.subr.mxu0 0.0
        %1269 = vmatpush1.xpose.msra.mxu0 0.0
        %1270 = vmatprep.subr.mxu0 0.0
        %1271 = vmatpush1.xpose.msra.mxu0 0.0
        %1272 = vmatprep.subr.mxu0 0.0
        %1273 = vmatpush1.xpose.msra.mxu0 0.0
        %1274 = vmatprep.subr.mxu0 0.0
        %1275 = vmatpush1.xpose.msra.mxu0 0.0
        %1276 = vmatprep.subr.mxu0 0.0
        %1277 = vmatpush1.xpose.msra.mxu0 0.0
        %1278 = vmatprep.subr.mxu0 0.0
        %1279 = vmatpush1.xpose.msra.mxu0 0.0
        %1280 = vmatprep.subr.mxu0 0.0
        %1281 = vmatpush1.xpose.msra.mxu0 0.0
        %1282 = vmatprep.subr.mxu0 0.0
        %1283 = vmatpush1.xpose.msra.mxu0 0.0
        %1284 = vmatprep.subr.mxu0 0.0
        %1285 = vmatpush1.xpose.msra.mxu0 0.0
        %1286 = vmatprep.subr.mxu0 0.0
        %1287 = vmatpush1.xpose.msra.mxu0 0.0
        %1288 = vmatprep.subr.mxu0 0.0
        %1289 = vmatpush1.xpose.msra.mxu0 0.0
        %1290 = vmatprep.subr.mxu0 0.0
        %1291 = vmatpush1.xpose.msra.mxu0 0.0
        %1292 = vmatprep.subr.mxu0 0.0
        %1293 = vmatpush1.xpose.msra.mxu0 0.0
        %1294 = vmatprep.subr.mxu0 0.0
        %1295 = vmatpush1.xpose.msra.mxu0 0.0
        %1296 = vmatprep.subr.mxu0 0.0
        %1297 = vmatpush1.xpose.msra.mxu0 0.0
        %1298 = vmatprep.mubr.f32.mxu0 0.0
        %1299 = vmatmul.mubr.f32.gmra.mrb[0].mxu0 %v1230
        %v1300 = vpop.f32.mrb[0].mxu0
        %v1301 = vadd.f32 0.0, %v1300
        %v1302 = vpop.f32.mrb[0].mxu0
        %1303 = vdwg.mxu0
        %v1304 = vmul.f32 %v1301, 0.35355338
        %v1305 = vsel %vm578, %v1304, -inf
        %1306 = vmax.xlane.f32.xlu0 %v1305
        %v1307 = vpop.xlane.xlu0 %1306
        %v1308 = vsub.f32 %v1304, %v1307
        %v1309 = vmul.f32 %v1308, 1.442695
        %v1310 = vpow.pop %v1309
        %v1311 = vsel %vm578, %v1310, 0.0
        %1312 = vadd.xlane.f32.xlu0 %v1311
        %v1313 = vpop.xlane.xlu0 %1312
        %v1314 = vrcp.pop %v1313
        %v1315 = vmul.f32 %v1310, %v1314
        %1316 = vrot.lane.b32.xlu0 %v496, 40
        %v1317 = vpop.permute.xlu0 %1316
        %v1319 = vsel %vm592, %v1315, 0
        %v1321 = vsel %vm596, %v1317, 0
        %1323 = vmatprep.subr.mxu0 0.0
        %1324 = vmatpush1.msra.mxu0 %v1321
        %1325 = vmatprep.subr.mxu0 0.0
        %1326 = vmatpush1.msra.mxu0 0.0
        %1327 = vmatprep.subr.mxu0 0.0
        %1328 = vmatpush1.msra.mxu0 0.0
        %1329 = vmatprep.subr.mxu0 0.0
        %1330 = vmatpush1.msra.mxu0 0.0
        %1331 = vmatprep.subr.mxu0 0.0
        %1332 = vmatpush1.msra.mxu0 0.0
        %1333 = vmatprep.subr.mxu0 0.0
        %1334 = vmatpush1.msra.mxu0 0.0
        %1335 = vmatprep.subr.mxu0 0.0
        %1336 = vmatpush1.msra.mxu0 0.0
        %1337 = vmatprep.subr.mxu0 0.0
        %1338 = vmatpush1.msra.mxu0 0.0
        %1339 = vmatprep.subr.mxu0 0.0
        %1340 = vmatpush1.msra.mxu0 0.0
        %1341 = vmatprep.subr.mxu0 0.0
        %1342 = vmatpush1.msra.mxu0 0.0
        %1343 = vmatprep.subr.mxu0 0.0
        %1344 = vmatpush1.msra.mxu0 0.0
        %1345 = vmatprep.subr.mxu0 0.0
        %1346 = vmatpush1.msra.mxu0 0.0
        %1347 = vmatprep.subr.mxu0 0.0
        %1348 = vmatpush1.msra.mxu0 0.0
        %1349 = vmatprep.subr.mxu0 0.0
        %1350 = vmatpush1.msra.mxu0 0.0
        %1351 = vmatprep.subr.mxu0 0.0
        %1352 = vmatpush1.msra.mxu0 0.0
        %1353 = vmatprep.subr.mxu0 0.0
        %1354 = vmatpush1.msra.mxu0 0.0
        %1355 = vmatprep.subr.mxu0 0.0
        %1356 = vmatpush1.msra.mxu0 0.0
        %1357 = vmatprep.subr.mxu0 0.0
        %1358 = vmatpush1.msra.mxu0 0.0
        %1359 = vmatprep.subr.mxu0 0.0
        %1360 = vmatpush1.msra.mxu0 0.0
        %1361 = vmatprep.subr.mxu0 0.0
        %1362 = vmatpush1.msra.mxu0 0.0
        %1363 = vmatprep.subr.mxu0 0.0
        %1364 = vmatpush1.msra.mxu0 0.0
        %1365 = vmatprep.subr.mxu0 0.0
        %1366 = vmatpush1.msra.mxu0 0.0
        %1367 = vmatprep.subr.mxu0 0.0
        %1368 = vmatpush1.msra.mxu0 0.0
        %1369 = vmatprep.subr.mxu0 0.0
        %1370 = vmatpush1.msra.mxu0 0.0
        %1371 = vmatprep.subr.mxu0 0.0
        %1372 = vmatpush1.msra.mxu0 0.0
        %1373 = vmatprep.subr.mxu0 0.0
        %1374 = vmatpush1.msra.mxu0 0.0
        %1375 = vmatprep.subr.mxu0 0.0
        %1376 = vmatpush1.msra.mxu0 0.0
        %1377 = vmatprep.subr.mxu0 0.0
        %1378 = vmatpush1.msra.mxu0 0.0
        %1379 = vmatprep.subr.mxu0 0.0
        %1380 = vmatpush1.msra.mxu0 0.0
        %1381 = vmatprep.subr.mxu0 0.0
        %1382 = vmatpush1.msra.mxu0 0.0
        %1383 = vmatprep.subr.mxu0 0.0
        %1384 = vmatpush1.msra.mxu0 0.0
        %1385 = vmatprep.subr.mxu0 0.0
        %1386 = vmatpush1.msra.mxu0 0.0
        %1387 = vmatprep.mubr.f32.mxu0 0.0
        %1388 = vmatmul.mubr.f32.gmra.mrb[0].mxu0 %v1319
        %v1389 = vpop.f32.mrb[0].mxu0
        %v1390 = vadd.f32 0.0, %v1389
        %v1391 = vpop.f32.mrb[0].mxu0
        %1392 = vdwg.mxu0
        %v1393 = vld [vmem:[%s5 + $0x18] sm:$0xff]
        %v1395 = vsel %vm502, %v1390, 0
        %1397 = vmatprep.subr.mxu0 0.0
        %1398 = vmatpush1.msra.mxu0 %v1393
        %1399 = vmatprep.subr.mxu0 0.0
        %1400 = vmatpush1.msra.mxu0 0.0
        %1401 = vmatprep.subr.mxu0 0.0
        %1402 = vmatpush1.msra.mxu0 0.0
        %1403 = vmatprep.subr.mxu0 0.0
        %1404 = vmatpush1.msra.mxu0 0.0
        %1405 = vmatprep.subr.mxu0 0.0
        %1406 = vmatpush1.msra.mxu0 0.0
        %1407 = vmatprep.subr.mxu0 0.0
        %1408 = vmatpush1.msra.mxu0 0.0
        %1409 = vmatprep.subr.mxu0 0.0
        %1410 = vmatpush1.msra.mxu0 0.0
        %1411 = vmatprep.subr.mxu0 0.0
        %1412 = vmatpush1.msra.mxu0 0.0
        %1413 = vmatprep.subr.mxu0 0.0
        %1414 = vmatpush1.msra.mxu0 0.0
        %1415 = vmatprep.subr.mxu0 0.0
        %1416 = vmatpush1.msra.mxu0 0.0
        %1417 = vmatprep.subr.mxu0 0.0
        %1418 = vmatpush1.msra.mxu0 0.0
        %1419 = vmatprep.subr.mxu0 0.0
        %1420 = vmatpush1.msra.mxu0 0.0
        %1421 = vmatprep.subr.mxu0 0.0
        %1422 = vmatpush1.msra.mxu0 0.0
        %1423 = vmatprep.subr.mxu0 0.0
        %1424 = vmatpush1.msra.mxu0 0.0
        %1425 = vmatprep.subr.mxu0 0.0
        %1426 = vmatpush1.msra.mxu0 0.0
        %1427 = vmatprep.subr.mxu0 0.0
        %1428 = vmatpush1.msra.mxu0 0.0
        %1429 = vmatprep.subr.mxu0 0.0
        %1430 = vmatpush1.msra.mxu0 0.0
        %1431 = vmatprep.subr.mxu0 0.0
        %1432 = vmatpush1.msra.mxu0 0.0
        %1433 = vmatprep.subr.mxu0 0.0
        %1434 = vmatpush1.msra.mxu0 0.0
        %1435 = vmatprep.subr.mxu0 0.0
        %1436 = vmatpush1.msra.mxu0 0.0
        %1437 = vmatprep.subr.mxu0 0.0
        %1438 = vmatpush1.msra.mxu0 0.0
        %1439 = vmatprep.subr.mxu0 0.0
        %1440 = vmatpush1.msra.mxu0 0.0
        %1441 = vmatprep.subr.mxu0 0.0
        %1442 = vmatpush1.msra.mxu0 0.0
        %1443 = vmatprep.subr.mxu0 0.0
        %1444 = vmatpush1.msra.mxu0 0.0
        %1445 = vmatprep.subr.mxu0 0.0
        %1446 = vmatpush1.msra.mxu0 0.0
        %1447 = vmatprep.subr.mxu0 0.0
        %1448 = vmatpush1.msra.mxu0 0.0
        %1449 = vmatprep.subr.mxu0 0.0
        %1450 = vmatpush1.msra.mxu0 0.0
        %1451 = vmatprep.subr.mxu0 0.0
        %1452 = vmatpush1.msra.mxu0 0.0
        %1453 = vmatprep.subr.mxu0 0.0
        %1454 = vmatpush1.msra.mxu0 0.0
        %1455 = vmatprep.subr.mxu0 0.0
        %1456 = vmatpush1.msra.mxu0 0.0
        %1457 = vmatprep.subr.mxu0 0.0
        %1458 = vmatpush1.msra.mxu0 0.0
        %1459 = vmatprep.subr.mxu0 0.0
        %1460 = vmatpush1.msra.mxu0 0.0
        %1461 = vmatprep.mubr.f32.mxu0 0.0
        %1462 = vmatmul.mubr.f32.gmra.mrb[0].mxu0 %v1395
        %v1463 = vpop.f32.mrb[0].mxu0
        %v1464 = vadd.f32 0.0, %v1463
        %v1465 = vpop.f32.mrb[0].mxu0
        %1466 = vdwg.mxu0
        %v1467 = vadd.f32 %v1225, %v1464
        %v1468 = vlaneseq
        %v1469 = vshrl.u32 %v1468, 7
        %v1470 = vsub.s32 0, %v1469
        %v1471 = vrot.slane %v358, %v1470
        %v1472 = vadd.f32 %v1467, %v1471
        %v1473 = vadd.f32 %v416, %v1472
        %vm1474 = vcmask 254976
        %v1475 = vsel %vm1474, %v1473, 0.0
        %1476 = vadd.xlane.f32.xlu0 %v1475
        %v1477 = vpop.xlane.xlu0 %1476
        %v1478 = vrcp.pop 32.0
        %v1479 = vmul.f32 %v1477, %v1478
        %v1480 = vsub.f32 %v1473, %v1479
        %v1481 = vmul.f32 %v1480, %v1480
        %v1482 = vsel %vm1474, %v1481, 0.0
        %1483 = vadd.xlane.f32.xlu0 %v1482
        %v1484 = vpop.xlane.xlu0 %1483
        %v1485 = vmul.f32 %v1484, %v1478
        %v1486 = vadd.f32 %v1485, 1e-05
        %v1487 = vrsqrt.pop %v1486
        %v1488 = vmul.f32 %v1480, %v1487
        %v1489 = vlaneseq
        %v1490 = vshrl.u32 %v1489, 7
        %v1491 = vsub.s32 0, %v1490
        %v1492 = vrot.slane %v359, %v1491
        %v1493 = vmul.f32 %v1488, %v1492
        %v1494 = vlaneseq
        %v1495 = vshrl.u32 %v1494, 7
        %v1496 = vsub.s32 0, %v1495
        %v1497 = vrot.slane %v360, %v1496
        %v1498 = vadd.f32 %v1493, %v1497
        %v1499 = vld [vmem:[%s6] sm:$0xff]
        %v1500 = vld [vmem:[%s6 + $0x8] sm:$0xff]
        %v1501 = vld [vmem:[%s6 + $0x10] sm:$0xff]
        %v1502 = vld [vmem:[%s6 + $0x18] sm:$0xff]
        %v1503 = vlaneseq
        %v1504 = vshrl.u32 %v1503, 7
        %v1505 = vsub.s32 0, %v1504
        %v1506 = vrot.slane %v361, %v1505
        %v1508 = vsel %vm425, %v1498, 0
        %1510 = vmatprep.subr.mxu0 0.0
        %1511 = vmatpush1.msra.mxu0 %v1499
        %1512 = vmatprep.subr.mxu0 0.0
        %1513 = vmatpush1.msra.mxu0 %v1500
        %1514 = vmatprep.subr.mxu0 0.0
        %1515 = vmatpush1.msra.mxu0 %v1501
        %1516 = vmatprep.subr.mxu0 0.0
        %1517 = vmatpush1.msra.mxu0 %v1502
        %1518 = vmatprep.subr.mxu0 0.0
        %1519 = vmatpush1.msra.mxu0 0.0
        %1520 = vmatprep.subr.mxu0 0.0
        %1521 = vmatpush1.msra.mxu0 0.0
        %1522 = vmatprep.subr.mxu0 0.0
        %1523 = vmatpush1.msra.mxu0 0.0
        %1524 = vmatprep.subr.mxu0 0.0
        %1525 = vmatpush1.msra.mxu0 0.0
        %1526 = vmatprep.subr.mxu0 0.0
        %1527 = vmatpush1.msra.mxu0 0.0
        %1528 = vmatprep.subr.mxu0 0.0
        %1529 = vmatpush1.msra.mxu0 0.0
        %1530 = vmatprep.subr.mxu0 0.0
        %1531 = vmatpush1.msra.mxu0 0.0
        %1532 = vmatprep.subr.mxu0 0.0
        %1533 = vmatpush1.msra.mxu0 0.0
        %1534 = vmatprep.subr.mxu0 0.0
        %1535 = vmatpush1.msra.mxu0 0.0
        %1536 = vmatprep.subr.mxu0 0.0
        %1537 = vmatpush1.msra.mxu0 0.0
        %1538 = vmatprep.subr.mxu0 0.0
        %1539 = vmatpush1.msra.mxu0 0.0
        %1540 = vmatprep.subr.mxu0 0.0
        %1541 = vmatpush1.msra.mxu0 0.0
        %1542 = vmatprep.subr.mxu0 0.0
        %1543 = vmatpush1.msra.mxu0 0.0
        %1544 = vmatprep.subr.mxu0 0.0
        %1545 = vmatpush1.msra.mxu0 0.0
        %1546 = vmatprep.subr.mxu0 0.0
        %1547 = vmatpush1.msra.mxu0 0.0
        %1548 = vmatprep.subr.mxu0 0.0
        %1549 = vmatpush1.msra.mxu0 0.0
        %1550 = vmatprep.subr.mxu0 0.0
        %1551 = vmatpush1.msra.mxu0 0.0
        %1552 = vmatprep.subr.mxu0 0.0
        %1553 = vmatpush1.msra.mxu0 0.0
        %1554 = vmatprep.subr.mxu0 0.0
        %1555 = vmatpush1.msra.mxu0 0.0
        %1556 = vmatprep.subr.mxu0 0.0
        %1557 = vmatpush1.msra.mxu0 0.0
        %1558 = vmatprep.subr.mxu0 0.0
        %1559 = vmatpush1.msra.mxu0 0.0
        %1560 = vmatprep.subr.mxu0 0.0
        %1561 = vmatpush1.msra.mxu0 0.0
        %1562 = vmatprep.subr.mxu0 0.0
        %1563 = vmatpush1.msra.mxu0 0.0
        %1564 = vmatprep.subr.mxu0 0.0
        %1565 = vmatpush1.msra.mxu0 0.0
        %1566 = vmatprep.subr.mxu0 0.0
        %1567 = vmatpush1.msra.mxu0 0.0
        %1568 = vmatprep.subr.mxu0 0.0
        %1569 = vmatpush1.msra.mxu0 0.0
        %1570 = vmatprep.subr.mxu0 0.0
        %1571 = vmatpush1.msra.mxu0 0.0
        %1572 = vmatprep.subr.mxu0 0.0
        %1573 = vmatpush1.msra.mxu0 0.0
        %1574 = vmatprep.mubr.f32.mxu0 0.0
        %1575 = vmatmul.mubr.f32.gmra.mrb[0].mxu0 %v1508
        %v1576 = vpop.f32.mrb[0].mxu0
        %v1577 = vadd.f32 %v1506, %v1576
        %v1578 = vpop.f32.mrb[0].mxu0
        %1579 = vdwg.mxu0
        %v1580 = vmax.f32 %v1577, 0.0
        %v1581 = vld [vmem:[%s7] sm:$0xff]
        %v1582 = vld [vmem:[%s7 + $0x8] sm:$0xff]
        %v1583 = vld [vmem:[%s7 + $0x10] sm:$0xff]
        %v1584 = vld [vmem:[%s7 + $0x18] sm:$0xff]
        %v1585 = vlaneseq
        %v1586 = vshrl.u32 %v1585, 7
        %v1587 = vsub.s32 0, %v1586
        %v1588 = vrot.slane %v362, %v1587
        %v1590 = vsel %vm425, %v1580, 0
        %1592 = vmatprep.subr.mxu0 0.0
        %1593 = vmatpush1.msra.mxu0 %v1581
        %1594 = vmatprep.subr.mxu0 0.0
        %1595 = vmatpush1.msra.mxu0 %v1582
        %1596 = vmatprep.subr.mxu0 0.0
        %1597 = vmatpush1.msra.mxu0 %v1583
        %1598 = vmatprep.subr.mxu0 0.0
        %1599 = vmatpush1.msra.mxu0 %v1584
        %1600 = vmatprep.subr.mxu0 0.0
        %1601 = vmatpush1.msra.mxu0 0.0
        %1602 = vmatprep.subr.mxu0 0.0
        %1603 = vmatpush1.msra.mxu0 0.0
        %1604 = vmatprep.subr.mxu0 0.0
        %1605 = vmatpush1.msra.mxu0 0.0
        %1606 = vmatprep.subr.mxu0 0.0
        %1607 = vmatpush1.msra.mxu0 0.0
        %1608 = vmatprep.subr.mxu0 0.0
        %1609 = vmatpush1.msra.mxu0 0.0
        %1610 = vmatprep.subr.mxu0 0.0
        %1611 = vmatpush1.msra.mxu0 0.0
        %1612 = vmatprep.subr.mxu0 0.0
        %1613 = vmatpush1.msra.mxu0 0.0
        %1614 = vmatprep.subr.mxu0 0.0
        %1615 = vmatpush1.msra.mxu0 0.0
        %1616 = vmatprep.subr.mxu0 0.0
        %1617 = vmatpush1.msra.mxu0 0.0
        %1618 = vmatprep.subr.mxu0 0.0
        %1619 = vmatpush1.msra.mxu0 0.0
        %1620 = vmatprep.subr.mxu0 0.0
        %1621 = vmatpush1.msra.mxu0 0.0
        %1622 = vmatprep.subr.mxu0 0.0
        %1623 = vmatpush1.msra.mxu0 0.0
        %1624 = vmatprep.subr.mxu0 0.0
        %1625 = vmatpush1.msra.mxu0 0.0
        %1626 = vmatprep.subr.mxu0 0.0
        %1627 = vmatpush1.msra.mxu0 0.0
        %1628 = vmatprep.subr.mxu0 0.0
        %1629 = vmatpush1.msra.mxu0 0.0
        %1630 = vmatprep.subr.mxu0 0.0
        %1631 = vmatpush1.msra.mxu0 0.0
        %1632 = vmatprep.subr.mxu0 0.0
        %1633 = vmatpush1.msra.mxu0 0.0
        %1634 = vmatprep.subr.mxu0 0.0
        %1635 = vmatpush1.msra.mxu0 0.0
        %1636 = vmatprep.subr.mxu0 0.0
        %1637 = vmatpush1.msra.mxu0 0.0
        %1638 = vmatprep.subr.mxu0 0.0
        %1639 = vmatpush1.msra.mxu0 0.0
        %1640 = vmatprep.subr.mxu0 0.0
        %1641 = vmatpush1.msra.mxu0 0.0
        %1642 = vmatprep.subr.mxu0 0.0
        %1643 = vmatpush1.msra.mxu0 0.0
        %1644 = vmatprep.subr.mxu0 0.0
        %1645 = vmatpush1.msra.mxu0 0.0
        %1646 = vmatprep.subr.mxu0 0.0
        %1647 = vmatpush1.msra.mxu0 0.0
        %1648 = vmatprep.subr.mxu0 0.0
        %1649 = vmatpush1.msra.mxu0 0.0
        %1650 = vmatprep.subr.mxu0 0.0
        %1651 = vmatpush1.msra.mxu0 0.0
        %1652 = vmatprep.subr.mxu0 0.0
        %1653 = vmatpush1.msra.mxu0 0.0
        %1654 = vmatprep.subr.mxu0 0.0
        %1655 = vmatpush1.msra.mxu0 0.0
        %1656 = vmatprep.mubr.f32.mxu0 0.0
        %1657 = vmatmul.mubr.f32.gmra.mrb[0].mxu0 %v1590
        %v1658 = vpop.f32.mrb[0].mxu0
        %v1659 = vadd.f32 %v1588, %v1658
        %v1660 = vpop.f32.mrb[0].mxu0
        %1661 = vdwg.mxu0
        %v1662 = vadd.f32 %v1498, %v1659
        %v1663 = vsel %vm1474, %v1662, 0.0
        %1664 = vadd.xlane.f32.xlu0 %v1663
        %v1665 = vpop.xlane.xlu0 %1664
        %v1666 = vmul.f32 %v1665, %v1478
        %v1667 = vsub.f32 %v1662, %v1666
        %v1668 = vmul.f32 %v1667, %v1667
        %v1669 = vsel %vm1474, %v1668, 0.0
        %1670 = vadd.xlane.f32.xlu0 %v1669
        %v1671 = vpop.xlane.xlu0 %1670
        %v1672 = vmul.f32 %v1671, %v1478
        %v1673 = vadd.f32 %v1672, 1e-05
        %v1674 = vrsqrt.pop %v1673
        %v1675 = vmul.f32 %v1667, %v1674
        %v1676 = vlaneseq
        %v1677 = vshrl.u32 %v1676, 7
        %v1678 = vsub.s32 0, %v1677
        %v1679 = vrot.slane %v363, %v1678
        %v1680 = vmul.f32 %v1675, %v1679
        %v1681 = vlaneseq
        %v1682 = vshrl.u32 %v1681, 7
        %v1683 = vsub.s32 0, %v1682
        %v1684 = vrot.slane %v364, %v1683
        %v1685 = vadd.f32 %v1680, %v1684
        %v1686 = vld [vmem:[#allocation2] sm:$0x3]
        %v1687 = vld [vmem:[%s349] sm:$0xff]
        %v1688 = vld [vmem:[%s349 + $0x8] sm:$0xff]
        %v1689 = vld [vmem:[%s349 + $0x10] sm:$0xff]
        %v1690 = vld [vmem:[%s349 + $0x18] sm:$0xff]
        %v1692 = vsel %vm425, %v1685, 0
        %1694 = vmatprep.subr.mxu0 0.0
        %1695 = vmatpush1.msra.mxu0 %v1687
        %1696 = vmatprep.subr.mxu0 0.0
        %1697 = vmatpush1.msra.mxu0 %v1688
        %1698 = vmatprep.subr.mxu0 0.0
        %1699 = vmatpush1.msra.mxu0 %v1689
        %1700 = vmatprep.subr.mxu0 0.0
        %1701 = vmatpush1.msra.mxu0 %v1690
        %1702 = vmatprep.subr.mxu0 0.0
        %1703 = vmatpush1.msra.mxu0 0.0
        %1704 = vmatprep.subr.mxu0 0.0
        %1705 = vmatpush1.msra.mxu0 0.0
        %1706 = vmatprep.subr.mxu0 0.0
        %1707 = vmatpush1.msra.mxu0 0.0
        %1708 = vmatprep.subr.mxu0 0.0
        %1709 = vmatpush1.msra.mxu0 0.0
        %1710 = vmatprep.subr.mxu0 0.0
        %1711 = vmatpush1.msra.mxu0 0.0
        %1712 = vmatprep.subr.mxu0 0.0
        %1713 = vmatpush1.msra.mxu0 0.0
        %1714 = vmatprep.subr.mxu0 0.0
        %1715 = vmatpush1.msra.mxu0 0.0
        %1716 = vmatprep.subr.mxu0 0.0
        %1717 = vmatpush1.msra.mxu0 0.0
        %1718 = vmatprep.subr.mxu0 0.0
        %1719 = vmatpush1.msra.mxu0 0.0
        %1720 = vmatprep.subr.mxu0 0.0
        %1721 = vmatpush1.msra.mxu0 0.0
        %1722 = vmatprep.subr.mxu0 0.0
        %1723 = vmatpush1.msra.mxu0 0.0
        %1724 = vmatprep.subr.mxu0 0.0
        %1725 = vmatpush1.msra.mxu0 0.0
        %1726 = vmatprep.subr.mxu0 0.0
        %1727 = vmatpush1.msra.mxu0 0.0
        %1728 = vmatprep.subr.mxu0 0.0
        %1729 = vmatpush1.msra.mxu0 0.0
        %1730 = vmatprep.subr.mxu0 0.0
        %1731 = vmatpush1.msra.mxu0 0.0
        %1732 = vmatprep.subr.mxu0 0.0
        %1733 = vmatpush1.msra.mxu0 0.0
        %1734 = vmatprep.subr.mxu0 0.0
        %1735 = vmatpush1.msra.mxu0 0.0
        %1736 = vmatprep.subr.mxu0 0.0
        %1737 = vmatpush1.msra.mxu0 0.0
        %1738 = vmatprep.subr.mxu0 0.0
        %1739 = vmatpush1.msra.mxu0 0.0
        %1740 = vmatprep.subr.mxu0 0.0
        %1741 = vmatpush1.msra.mxu0 0.0
        %1742 = vmatprep.subr.mxu0 0.0
        %1743 = vmatpush1.msra.mxu0 0.0
        %1744 = vmatprep.subr.mxu0 0.0
        %1745 = vmatpush1.msra.mxu0 0.0
        %1746 = vmatprep.subr.mxu0 0.0
        %1747 = vmatpush1.msra.mxu0 0.0
        %1748 = vmatprep.subr.mxu0 0.0
        %1749 = vmatpush1.msra.mxu0 0.0
        %1750 = vmatprep.subr.mxu0 0.0
        %1751 = vmatpush1.msra.mxu0 0.0
        %1752 = vmatprep.subr.mxu0 0.0
        %1753 = vmatpush1.msra.mxu0 0.0
        %1754 = vmatprep.subr.mxu0 0.0
        %1755 = vmatpush1.msra.mxu0 0.0
        %1756 = vmatprep.subr.mxu0 0.0
        %1757 = vmatpush1.msra.mxu0 0.0
        %1758 = vmatprep.mubr.f32.mxu0 0.0
        %1759 = vmatmul.mubr.f32.gmra.mrb[0].mxu0 %v1692
        %v1760 = vpop.f32.mrb[0].mxu0
        %v1761 = vadd.f32 0.0, %v1760
        %v1762 = vpop.f32.mrb[0].mxu0
        %1763 = vdwg.mxu0
        %v1764 = vadd.f32 %v1686, %v1761
        %1765 = vst.msk [vmem:[#allocation2] sm:$0x3] %vm578, %v1764
        %p1766 = scmp.eq.s32.totalorder %s21, 7
        // Predicated region
        $region61: #{tfeq_conv_forward.1} parent=55 // pred_check
          %p1767 = pneg %p1766
        $region62: #{tfeq_conv_forward.1} parent=55 // pred_check_branch
          %1769 = sbr.rel (%p1767) target = $region64
        $region63: #{tfeq_conv_forward.1} parent=55 // pred_region
          %v1770 = vld [vmem:[#allocation2] sm:$0x3]
          %v1771 = vld [vmem:[%s2 + $0x9] sm:$0x1]
          %v1772 = vlaneseq
          %v1773 = vshrl.u32 %v1772, 7
          %v1774 = vsub.s32 0, %v1773
          %v1775 = vrot.slane %v1771, %v1774
          %v1776 = vadd.f32 %v1770, %v1775
          %v1777 = vsel %vm578, %v1776, -inf
          %1778 = vmax.xlane.f32.xlu0 %v1777
          %v1779 = vpop.xlane.xlu0 %1778
          %v1780 = vsub.f32 %v1776, %v1779
          %v1781 = vmul.f32 %v1780, 1.442695
          %v1782 = vpow.pop %v1781
          %v1783 = vsel %vm578, %v1782, 0.0
          %1784 = vadd.xlane.f32.xlu0 %v1783
          %v1785 = vpop.xlane.xlu0 %1784
          %v1786 = vlog2.pop %v1785
          %v1787 = vmul.f32 %v1786, 0.6931472
          %v1788 = vsub.f32 %v1780, %v1787
          %1789 = vst.msk [vmem:[#allocation3] sm:$0x3] %vm578, %v1788
        $region64: #{tfeq_conv_forward.1} parent=55 // pred_fallthru
          _
        // Predicated region
        $region65: #{tfeq_conv_forward.1} parent=55 // pred_check
          %p1790 = pneg %p238
        $region66: #{tfeq_conv_forward.1} parent=55 // pred_check_branch
          %1792 = sbr.rel (%p1790) target = $region68
        $region67: #{tfeq_conv_forward.1} parent=55 // pred_region
          %s1794 = ssub.s32 32, 32
          %1795 = vsyncadd [#allocation4], %s1794
          %s1797 = sshll.u32 [#allocation3], 4
          %s1798 = int_to_ptr.vmem [resolvable:$true] %s1797
          %1800 = dma.vmem_to_hbm [thread:$0]  %s1798, 32, %s9, [#allocation4]
        $region68: #{tfeq_conv_forward.1} parent=55 // pred_fallthru
          _
        // Predicated region
        $region69: #{tfeq_conv_forward.1} parent=55 // pred_check
          %p1801 = pneg %p238
        $region70: #{tfeq_conv_forward.1} parent=55 // pred_check_branch
          %1803 = sbr.rel (%p1801) target = $region72
        $region71: #{tfeq_conv_forward.1} parent=55 // pred_region
          %1804 = dma.done [#allocation4], 32
        $region72: #{tfeq_conv_forward.1} parent=55 // pred_fallthru
          _
      $region56: #{tfeq_conv_forward.1} parent=5 // pred_fallthru
        _
      %p1805 = scmp.le.s32.totalorder 2, %s16
      // Predicated region
      $region73: #{tfeq_conv_forward.1} parent=5 // pred_check
        %p1806 = pneg %p1805
      $region74: #{tfeq_conv_forward.1} parent=5 // pred_check_branch
        %1808 = sbr.rel (%p1806) target = $region76
      $region75: #{tfeq_conv_forward.1} parent=5 // pred_region
        %s1809 = ssub.s32 %s16, 2
      $region76: #{tfeq_conv_forward.1} parent=5 // pred_fallthru
        _
    $region6: #{tfeq_conv_forward.1} parent=1 // loop_footer
      %s20 = sadd.s32 1, %s16
    $region7: #{tfeq_conv_forward.1} parent=1 // loop_footer_branch
      %15 = sbr.rel target = $region3
    $region8: #{tfeq_conv_forward.1} parent=1 // loop_exit
      _
    %1810 = vsyncpa [#allocation4], 1
    %s1811 = scalar_lea.sflag [#allocation4], 1
    %1812 = vsyncpa %s1811, 1

</llo_original>
